<compile_context>
chip_gen: v6e
topology: v6e:2x2x1
jax: 0.10.0
libtpu: 0.0.40
codegen_flags: <defaults>
</compile_context>

<pallas_src>
import functools

import jax
import jax.numpy as jnp
from jax.experimental import pallas as pl
from jax.experimental.pallas import tpu as pltpu


def _round_up(x, m):
    return ((x + m - 1) // m) * m


def _conv_lstm_cell_kernel(C, out_pad, patches_ref, w_ref, b_ref, state_ref, out_ref):
    """One ConvLSTM cell step for one M-tile of rows (all operands in VMEM).

    patches_ref : (tile_m, K)      bf16   im2col'd [x ; h_cur] rows
    w_ref       : (K, 4C)          bf16   conv weights (cross-correlation layout)
    b_ref       : (1, 4C)          f32    conv bias
    state_ref   : (tile_m, 4C)     f32    packed [c_cur | Wci | Wcf | Wco]
    out_ref     : (tile_m, OUT_L)  f32    packed [h_next | c_next | 0-pad]
    """
    # ---- convolution as ONE MXU matmul over the im2col'd patches -------------
    # (bias folded in directly; f32 accumulation via preferred_element_type)
    gates = jnp.dot(patches_ref[...], w_ref[...],
                    preferred_element_type=jnp.float32) + b_ref[...]     # (tm, 4C)

    # ---- packed per-row state: [c_cur | Wci | Wcf | Wco] ---------------------
    state = state_ref[...]                                               # (tm, 4C)
    c_cur = state[:, :C]
    peep_if = state[:, C:3 * C]          # [Wci | Wcf]
    w_co = state[:, 3 * C:]

    # gate layout along lanes follows torch.split order: [i | f | o | g]
    c2 = jnp.concatenate([c_cur, c_cur], axis=-1)                        # (tm, 2C)
    gate_if = jax.nn.sigmoid(gates[:, :2 * C] + peep_if * c2)            # one wide sigmoid
    gate_i = gate_if[:, :C]
    gate_f = gate_if[:, C:]
    gate_g = jnp.tanh(gates[:, 3 * C:])
    c_next = gate_f * c_cur + gate_i * gate_g
    gate_o = jax.nn.sigmoid(gates[:, 2 * C:3 * C] + w_co * c_next)
    h_next = gate_o * jnp.tanh(c_next)

    # lane-dense packed output: [h_next | c_next | zero pad up to 128-multiple]
    parts = [h_next, c_next]
    if out_pad:
        parts.append(jnp.zeros((h_next.shape[0], out_pad), jnp.float32))
    out_ref[...] = jnp.concatenate(parts, axis=-1)


def prepare_params(params, hidden_channels, kernel_size, height, width):
    """Hoistable per-layer parameter re-layout (do this ONCE, not per timestep)."""
    C = hidden_channels
    kh, kw = kernel_size
    c_tot = params["w_conv"].shape[1]
    # conv weight (4C, c_tot, kh, kw) -> (kh*kw*c_tot, 4C), matching im2col order
    # [(dy, dx) outer, channel inner]; bf16 for the MXU.
    w = jnp.transpose(params["w_conv"], (2, 3, 1, 0)).reshape(kh * kw * c_tot, 4 * C)
    w = w.astype(jnp.bfloat16)
    b = params["b_conv"].reshape(1, 4 * C).astype(jnp.float32)

    def flat(p):  # (1, C, H, W) -> (H*W, C)
        return jnp.transpose(p, (0, 2, 3, 1)).reshape(height * width, C)

    peep = jnp.concatenate(
        [flat(params["w_ci"]), flat(params["w_cf"]), flat(params["w_co"])],
        axis=-1).astype(jnp.float32)                                     # (HW, 3C)
    return {"w": w, "b": b, "peep": peep}


def conv_lstm_layer_forward_nhwc(x_nhwc, h_nhwc, c_nhwc, prepped, *,
                                 hidden_channels, kernel_size, tile_m=256):
    """Core forward in NHWC layout; returns (h_next, c_next) as (B, H, W, C) f32."""
    B, H, W, c_in = x_nhwc.shape
    C = hidden_channels
    kh, kw = kernel_size
    # PyTorch padding=(k-1)//2 gives 'same' output only for odd kernels.
    assert kh % 2 == 1 and kw % 2 == 1, "odd kernel sizes only (matches module usage)"
    ph, pw = (kh - 1) // 2, (kw - 1) // 2
    c_tot = c_in + C
    K = kh * kw * c_tot
    HW = H * W
    M = B * HW

    # ---- im2col in the wrapper (XLA): (B*HW, K) bf16 -------------------------
    combined = jnp.concatenate([x_nhwc, h_nhwc], axis=-1)                # (B,H,W,c_tot)
    padded = jnp.pad(combined, ((0, 0), (ph, ph), (pw, pw), (0, 0)))
    cols = [padded[:, dy:dy + H, dx:dx + W, :]
            for dy in range(kh) for dx in range(kw)]
    patches = jnp.concatenate(cols, axis=-1).reshape(M, K).astype(jnp.bfloat16)

    # ---- packed per-row state [c_cur | Wci | Wcf | Wco] : (B*HW, 4C) f32 -----
    c_flat = c_nhwc.reshape(B, HW, C).astype(jnp.float32)
    peep_b = jnp.broadcast_to(prepped["peep"][None], (B, HW, 3 * C))
    state = jnp.concatenate([c_flat, peep_b], axis=-1).reshape(M, 4 * C)

    # ---- tile the (batch-folded) M dimension ----------------------------------
    tile_m = min(tile_m, _round_up(M, 8))
    n_tiles = pl.cdiv(M, tile_m)
    m_pad = n_tiles * tile_m
    if m_pad != M:
        patches = jnp.pad(patches, ((0, m_pad - M), (0, 0)))
        state = jnp.pad(state, ((0, m_pad - M), (0, 0)))

    out_lanes = _round_up(2 * C, 128)          # lane-dense output slab
    out_pad = out_lanes - 2 * C

    kernel = functools.partial(_conv_lstm_cell_kernel, C, out_pad)

    cost = pl.CostEstimate(
        flops=2 * m_pad * K * 4 * C,
        transcendentals=5 * m_pad * C,
        bytes_accessed=(patches.size * 2 + prepped["w"].size * 2 + 4 * C * 4
                        + state.size * 4 + m_pad * out_lanes * 4),
    )

    out = pl.pallas_call(
        kernel,
        out_shape=jax.ShapeDtypeStruct((m_pad, out_lanes), jnp.float32),
        grid_spec=pltpu.PrefetchScalarGridSpec(
            num_scalar_prefetch=0,
            grid=(n_tiles,),
            in_specs=[
                pl.BlockSpec((tile_m, K), lambda m: (m, 0)),        # im2col patches
                pl.BlockSpec((K, 4 * C), lambda m: (0, 0)),         # weights (constant)
                pl.BlockSpec((1, 4 * C), lambda m: (0, 0)),         # bias (constant)
                pl.BlockSpec((tile_m, 4 * C), lambda m: (m, 0)),    # packed state
            ],
            out_specs=pl.BlockSpec((tile_m, out_lanes), lambda m: (m, 0)),
        ),
        compiler_params=pltpu.CompilerParams(
            dimension_semantics=("parallel",)),
        cost_estimate=cost,
    )(patches, prepped["w"], prepped["b"], state)

    out = out[:M].reshape(B, H, W, out_lanes)
    h_next = out[..., :C]
    c_next = out[..., C:2 * C]
    return h_next, c_next


def conv_lstm_layer_forward(input_tensor, cur_state, params, *,
                            hidden_channels, kernel_size, tile_m=256):
    """Module-compatible forward: NCHW in, (h_next, c_next) NCHW f32 out."""
    B, _, H, W = input_tensor.shape
    C = hidden_channels

    h_cur, c_cur = cur_state
    if h_cur is None:                      # cur_state[0] == None branch: zeros
        h_cur = jnp.zeros((B, C, H, W), jnp.float32)
        c_cur = jnp.zeros((B, C, H, W), jnp.float32)

    def to_nhwc(t):
        return jnp.transpose(t, (0, 2, 3, 1))

    def to_nchw(t):
        return jnp.transpose(t, (0, 3, 1, 2))

    prepped = prepare_params(params, C, kernel_size, H, W)
    h_next, c_next = conv_lstm_layer_forward_nhwc(
        to_nhwc(input_tensor), to_nhwc(h_cur), to_nhwc(c_cur), prepped,
        hidden_channels=C, kernel_size=kernel_size, tile_m=tile_m)
    return to_nchw(h_next), to_nchw(c_next)


def _reference_forward(input_tensor, h_cur, c_cur, params, *, padding):
    """Pure-JAX (XLA) reference of the same forward, for sanity checking."""
    combined = jnp.concatenate([input_tensor, h_cur], axis=1)            # NCHW
    conv = jax.lax.conv_general_dilated(
        combined, params["w_conv"], window_strides=(1, 1),
        padding=[(padding[0], padding[0]), (padding[1], padding[1])],
        dimension_numbers=("NCHW", "OIHW", "NCHW"))
    conv = conv + params["b_conv"].reshape(1, -1, 1, 1)
    cc_i, cc_f, cc_o, cc_g = jnp.split(conv, 4, axis=1)
    gate_i = jax.nn.sigmoid(cc_i + params["w_ci"] * c_cur)
    gate_f = jax.nn.sigmoid(cc_f + params["w_cf"] * c_cur)
    gate_g = jnp.tanh(cc_g)
    c_next = gate_f * c_cur + gate_i * gate_g
    gate_o = jax.nn.sigmoid(cc_o + params["w_co"] * c_next)
    h_next = gate_o * jnp.tanh(c_next)
    return h_next, c_next


if __name__ == "__main__":
    # Small shapes consistent with the module's forward (NCHW input).
    B = 2
    C_IN = 4
    C_HID = 32
    H = W = 16
    KSIZE = (3, 3)

    key = jax.random.PRNGKey(0)
    ks = jax.random.split(key, 8)

    # initialize_weights(): xavier_normal_ conv weight, uniform bias
    fan_in = (C_IN + C_HID) * KSIZE[0] * KSIZE[1]
    fan_out = 4 * C_HID * KSIZE[0] * KSIZE[1]
    xavier_std = (2.0 / (fan_in + fan_out)) ** 0.5
    params = {
        "w_conv": xavier_std * jax.random.normal(
            ks[0], (4 * C_HID, C_IN + C_HID, KSIZE[0], KSIZE[1]), jnp.float32),
        "b_conv": jax.random.uniform(ks[1], (4 * C_HID,), jnp.float32),
        # peephole params are zero-initialized by the module; small random values
        # here exercise the full peephole math path.
        "w_ci": 0.1 * jax.random.normal(ks[2], (1, C_HID, H, W), jnp.float32),
        "w_cf": 0.1 * jax.random.normal(ks[3], (1, C_HID, H, W), jnp.float32),
        "w_co": 0.1 * jax.random.normal(ks[4], (1, C_HID, H, W), jnp.float32),
    }

    x = jax.random.normal(ks[5], (B, C_IN, H, W), jnp.float32)
    h_cur = 0.5 * jax.random.normal(ks[6], (B, C_HID, H, W), jnp.float32)
    c_cur = 0.5 * jax.random.normal(ks[7], (B, C_HID, H, W), jnp.float32)

    h_next, c_next = conv_lstm_layer_forward(
        x, (h_cur, c_cur), params,
        hidden_channels=C_HID, kernel_size=KSIZE)
    jax.block_until_ready((h_next, c_next))

    # sanity check against pure-JAX reference (bf16 MXU inputs -> loose tol)
    pad = ((KSIZE[0] - 1) // 2, (KSIZE[1] - 1) // 2)
    h_exp, c_exp = _reference_forward(x, h_cur, c_cur, params, padding=pad)
    assert jnp.allclose(h_next, h_exp, atol=2e-2, rtol=2e-2)
    assert jnp.allclose(c_next, c_exp, atol=2e-2, rtol=2e-2)

    print("KERNEL_OK")
</pallas_src>

<mosaic_0001>
module attributes {stable_mosaic.version = 11 : i64} {
  func.func @_conv_lstm_cell_kernel(%arg0: i32, %arg1: memref<256x324xbf16, #tpu.memory_space<vmem>>, %arg2: memref<324x128xbf16, #tpu.memory_space<vmem>>, %arg3: memref<1x128xf32, #tpu.memory_space<vmem>>, %arg4: memref<256x128xf32, #tpu.memory_space<vmem>>, %arg5: memref<256x128xf32, #tpu.memory_space<vmem>>) attributes {dimension_semantics = [#tpu.dimension_semantics<parallel>], iteration_bounds = array<i64: 2>, scalar_prefetch = 0 : i64, scratch_operands = 0 : i64, tpu.core_type = #tpu.core_type<tc>, window_params = [{transform_indices = @transform_0, window_bounds = array<i64: 256, 324>}, {pipeline_mode = #tpu.pipeline_mode<synchronous>, transform_indices = @transform_1, window_bounds = array<i64: 324, 128>}, {pipeline_mode = #tpu.pipeline_mode<synchronous>, transform_indices = @transform_2, window_bounds = array<i64: 1, 128>}, {transform_indices = @transform_3, window_bounds = array<i64: 256, 128>}, {transform_indices = @transform_4, window_bounds = array<i64: 256, 128>}]} {
    %c0 = arith.constant 0 : index
    %c0_0 = arith.constant 0 : index
    %0 = vector.load %arg1[%c0, %c0_0] : memref<256x324xbf16, #tpu.memory_space<vmem>>, vector<256x324xbf16>
    %c0_1 = arith.constant 0 : index
    %c0_2 = arith.constant 0 : index
    %1 = vector.load %arg2[%c0_1, %c0_2] : memref<324x128xbf16, #tpu.memory_space<vmem>>, vector<324x128xbf16>
    %cst = arith.constant dense<0.000000e+00> : vector<256x128xf32>
    %2 = tpu.matmul %0, %1, %cst {dimension_numbers = #tpu.dot_dimension_numbers<[1], [0], [0], [1], [0, 0, 1, 1], [], []>} : vector<256x324xbf16>, vector<324x128xbf16>, vector<256x128xf32> -> vector<256x128xf32>
    %c0_3 = arith.constant 0 : index
    %c0_4 = arith.constant 0 : index
    %3 = vector.load %arg3[%c0_3, %c0_4] : memref<1x128xf32, #tpu.memory_space<vmem>>, vector<1x128xf32>
    %4 = vector.broadcast %3 : vector<1x128xf32> to vector<256x128xf32>
    %5 = arith.addf %2, %4 : vector<256x128xf32>
    %c0_5 = arith.constant 0 : index
    %c0_6 = arith.constant 0 : index
    %6 = vector.load %arg4[%c0_5, %c0_6] : memref<256x128xf32, #tpu.memory_space<vmem>>, vector<256x128xf32>
    %7 = vector.extract_strided_slice %6 {offsets = [0, 0], sizes = [256, 32], strides = [1, 1]} : vector<256x128xf32> to vector<256x32xf32>
    %8 = vector.extract_strided_slice %6 {offsets = [0, 32], sizes = [256, 64], strides = [1, 1]} : vector<256x128xf32> to vector<256x64xf32>
    %9 = vector.extract_strided_slice %6 {offsets = [0, 96], sizes = [256, 32], strides = [1, 1]} : vector<256x128xf32> to vector<256x32xf32>
    %10 = tpu.concatenate %7, %7 in 1 : vector<256x32xf32>, vector<256x32xf32> -> vector<256x64xf32>
    %11 = vector.extract_strided_slice %5 {offsets = [0, 0], sizes = [256, 64], strides = [1, 1]} : vector<256x128xf32> to vector<256x64xf32>
    %12 = arith.mulf %8, %10 : vector<256x64xf32>
    %13 = arith.addf %11, %12 : vector<256x64xf32>
    %14 = arith.negf %13 : vector<256x64xf32>
    %15 = math.exp %14 : vector<256x64xf32>
    %cst_7 = arith.constant 1.000000e+00 : f32
    %16 = vector.broadcast %cst_7 : f32 to vector<256x64xf32>
    %17 = arith.addf %16, %15 : vector<256x64xf32>
    %18 = arith.divf %16, %17 : vector<256x64xf32>
    %19 = vector.extract_strided_slice %18 {offsets = [0, 0], sizes = [256, 32], strides = [1, 1]} : vector<256x64xf32> to vector<256x32xf32>
    %20 = vector.extract_strided_slice %18 {offsets = [0, 32], sizes = [256, 32], strides = [1, 1]} : vector<256x64xf32> to vector<256x32xf32>
    %21 = vector.extract_strided_slice %5 {offsets = [0, 96], sizes = [256, 32], strides = [1, 1]} : vector<256x128xf32> to vector<256x32xf32>
    %22 = math.tanh %21 : vector<256x32xf32>
    %23 = arith.mulf %20, %7 : vector<256x32xf32>
    %24 = arith.mulf %19, %22 : vector<256x32xf32>
    %25 = arith.addf %23, %24 : vector<256x32xf32>
    %26 = vector.extract_strided_slice %5 {offsets = [0, 64], sizes = [256, 32], strides = [1, 1]} : vector<256x128xf32> to vector<256x32xf32>
    %27 = arith.mulf %9, %25 : vector<256x32xf32>
    %28 = arith.addf %26, %27 : vector<256x32xf32>
    %29 = arith.negf %28 : vector<256x32xf32>
    %30 = math.exp %29 : vector<256x32xf32>
    %cst_8 = arith.constant 1.000000e+00 : f32
    %31 = vector.broadcast %cst_8 : f32 to vector<256x32xf32>
    %32 = arith.addf %31, %30 : vector<256x32xf32>
    %33 = arith.divf %31, %32 : vector<256x32xf32>
    %34 = math.tanh %25 : vector<256x32xf32>
    %35 = arith.mulf %33, %34 : vector<256x32xf32>
    %cst_9 = arith.constant 0.000000e+00 : f32
    %36 = vector.broadcast %cst_9 : f32 to vector<256x64xf32>
    %37 = tpu.concatenate %35, %25, %36 in 1 : vector<256x32xf32>, vector<256x32xf32>, vector<256x64xf32> -> vector<256x128xf32>
    %c0_10 = arith.constant 0 : index
    %c0_11 = arith.constant 0 : index
    %38 = vector.load %arg5[%c0_10, %c0_11] : memref<256x128xf32, #tpu.memory_space<vmem>>, vector<256x128xf32>
    tpu.vector_store %arg5[%c0_10, %c0_11], %37 {strides = array<i32>} : memref<256x128xf32, #tpu.memory_space<vmem>>, vector<256x128xf32>,
    return
  }
  func.func @transform_0(%arg0: i32) -> (i32, i32) {
    %c0_i32 = arith.constant 0 : i32
    %c0_i32_0 = arith.constant 0 : i32
    return %arg0, %c0_i32 : i32, i32
  }
  func.func @transform_1(%arg0: i32) -> (i32, i32) {
    %c0_i32 = arith.constant 0 : i32
    %c0_i32_0 = arith.constant 0 : i32
    %c0_i32_1 = arith.constant 0 : i32
    return %c0_i32, %c0_i32_0 : i32, i32
  }
  func.func @transform_2(%arg0: i32) -> (i32, i32) {
    %c0_i32 = arith.constant 0 : i32
    %c0_i32_0 = arith.constant 0 : i32
    %c0_i32_1 = arith.constant 0 : i32
    return %c0_i32, %c0_i32_0 : i32, i32
  }
  func.func @transform_3(%arg0: i32) -> (i32, i32) {
    %c0_i32 = arith.constant 0 : i32
    %c0_i32_0 = arith.constant 0 : i32
    return %arg0, %c0_i32 : i32, i32
  }
  func.func @transform_4(%arg0: i32) -> (i32, i32) {
    %c0_i32 = arith.constant 0 : i32
    %c0_i32_0 = arith.constant 0 : i32
    return %arg0, %c0_i32 : i32, i32
  }
}

</mosaic_0001>

<llo_original>
// kernel: tpu_custom_call.1
$region0: #{tpu_custom_call.1}
  #allocation0 [shape = 'u32[]', space=smem, size = 0x4, offset = 0x4, fixed_abs, tag = 'smem constant byte address 0x4 - core index']
  #allocation1 [shape = 'u32[144,128]{1,0:T(1,128)}', space=vmem, size = 0x12000, scoped, tag = 'internal scratch']
  %s0 = inlined_call_operand.vmem [shape: bf16[512,324], index: 0, kind: input, shape index: {}]
  %s1 = inlined_call_operand.vmem [shape: bf16[324,128], index: 1, kind: input, shape index: {}]
  %s2 = inlined_call_operand.vmem [shape: f32[1,128], index: 2, kind: input, shape index: {}]
  %s3 = inlined_call_operand.vmem [shape: f32[512,128], index: 3, kind: input, shape index: {}]
  %s4 = inlined_call_operand.hbm [shape: f32[512,128], index: 4, kind: output, shape index: {}]
  %s5 = sld [smem:[#allocation0]]
  $region49: #{tpu_custom_call.1} parent=0
    _
  %s7 = ssub.s32 1, %s5
  %s8 = scalar_select 0, %s7, %s5
  $region1: #{tpu_custom_call.1} parent=0
    #allocation2 [shape = 'u8[262144]{0}', space=vmem, size = 0x40000, scoped, tag = 'output window, operand 0']
    #allocation3 [shape = 's32[2]{0}', space=sflag, size = 0x8, scoped, tag = 'scoped memory for tpu_custom_call.1']
    %9 = vsyncpa [#allocation3], 0
    %s10 = scalar_lea.sflag [#allocation3], 1
    %11 = vsyncpa %s10, 0
    loop: start=0, step=1, limit=4
    $region2: #{tpu_custom_call.1} parent=1 // loop_pre_header
      _
    $region3: #{tpu_custom_call.1} parent=1 // loop_header
      %s13 = sphi 0, %s17
      %p14 = scmp.ge.s32.totalorder %s13, 4
      %s23 = sphi 0, %s25
      %s26 = sphi 0, %s23
      %s27 = sphi 0, %s26
      %s43 = sphi 0, %s27
      %s47 = sphi 0, %s47
      %s49 = sphi 0, %s47
      %s50 = sphi 0, %s49
      %s64 = sphi 0, %s50
      %s68 = sphi 0, %s68
      %s70 = sphi 0, %s68
      %s71 = sphi 0, %s70
      %s85 = sphi 0, %s71
      %s91 = sphi 0, %s93
      %s94 = sphi 0, %s91
      %s95 = sphi 0, %s94
      %s111 = sphi 0, %s95
      %s117 = sphi 0, %s119
      %s120 = sphi 0, %s117
      %s121 = sphi 0, %s120
      %s137 = sphi 0, %s121
    $region4: #{tpu_custom_call.1} parent=1 // loop_header_branch
      %16 = sbr.rel (%p14) target = $region8
    $region5: #{tpu_custom_call.1} parent=1 // loop_body
      %s18 = ssub.s32 %s13, 1
      %s19 = ssub.s32 %s13, 2
      %s20 = sadd.s32 %s13, 1
      %s21 = ssub.s32 %s13, %s20
      %p22 = scmp.eq.s32.totalorder %s21, 0
      %s24 = sadd.s32 %s23, 1
      %s25 = scalar_select %p22, %s23, %s24
      %p28 = pneg %p22
      %p29 = scmp.eq.s32.totalorder %s13, 1
      %p30 = por %p28, %p29
      %p31 = scmp.ne.s32.totalorder %s23, %s26
      %p32 = scmp.eq.s32.totalorder %s13, 0
      %p33 = por %p31, %p32
      %p34 = scmp.ne.s32.totalorder %s23, %s26
      %p35 = scmp.eq.s32.totalorder %s18, 1
      %p36 = por %p34, %p35
      %p37 = scmp.ne.s32.totalorder %s26, %s27
      %p38 = scmp.eq.s32.totalorder %s18, 0
      %p39 = por %p37, %p38
      %p40 = scmp.ne.s32.totalorder %s26, %s27
      %p41 = scmp.eq.s32.totalorder %s19, 1
      %p42 = por %p40, %p41
      %p44 = scmp.ne.s32.totalorder %s27, %s43
      %p45 = scmp.eq.s32.totalorder %s19, 0
      %p46 = por %p44, %p45
      %s48 = sadd.s32 %s47, 1
      %p51 = scmp.eq.s32.totalorder %s13, 1
      %p52 = scmp.ne.s32.totalorder %s47, %s49
      %p53 = scmp.eq.s32.totalorder %s13, 0
      %p54 = por %p52, %p53
      %p55 = scmp.ne.s32.totalorder %s47, %s49
      %p56 = scmp.eq.s32.totalorder %s18, 1
      %p57 = por %p55, %p56
      %p58 = scmp.ne.s32.totalorder %s49, %s50
      %p59 = scmp.eq.s32.totalorder %s18, 0
      %p60 = por %p58, %p59
      %p61 = scmp.ne.s32.totalorder %s49, %s50
      %p62 = scmp.eq.s32.totalorder %s19, 1
      %p63 = por %p61, %p62
      %p65 = scmp.ne.s32.totalorder %s50, %s64
      %p66 = scmp.eq.s32.totalorder %s19, 0
      %p67 = por %p65, %p66
      %s69 = sadd.s32 %s68, 1
      %p72 = scmp.eq.s32.totalorder %s13, 1
      %p73 = scmp.ne.s32.totalorder %s68, %s70
      %p74 = scmp.eq.s32.totalorder %s13, 0
      %p75 = por %p73, %p74
      %p76 = scmp.ne.s32.totalorder %s68, %s70
      %p77 = scmp.eq.s32.totalorder %s18, 1
      %p78 = por %p76, %p77
      %p79 = scmp.ne.s32.totalorder %s70, %s71
      %p80 = scmp.eq.s32.totalorder %s18, 0
      %p81 = por %p79, %p80
      %p82 = scmp.ne.s32.totalorder %s70, %s71
      %p83 = scmp.eq.s32.totalorder %s19, 1
      %p84 = por %p82, %p83
      %p86 = scmp.ne.s32.totalorder %s71, %s85
      %p87 = scmp.eq.s32.totalorder %s19, 0
      %p88 = por %p86, %p87
      %s89 = ssub.s32 %s13, %s20
      %p90 = scmp.eq.s32.totalorder %s89, 0
      %s92 = sadd.s32 %s91, 1
      %s93 = scalar_select %p90, %s91, %s92
      %p96 = pneg %p90
      %p97 = scmp.eq.s32.totalorder %s13, 1
      %p98 = por %p96, %p97
      %p99 = scmp.ne.s32.totalorder %s91, %s94
      %p100 = scmp.eq.s32.totalorder %s13, 0
      %p101 = por %p99, %p100
      %p102 = scmp.ne.s32.totalorder %s91, %s94
      %p103 = scmp.eq.s32.totalorder %s18, 1
      %p104 = por %p102, %p103
      %p105 = scmp.ne.s32.totalorder %s94, %s95
      %p106 = scmp.eq.s32.totalorder %s18, 0
      %p107 = por %p105, %p106
      %p108 = scmp.ne.s32.totalorder %s94, %s95
      %p109 = scmp.eq.s32.totalorder %s19, 1
      %p110 = por %p108, %p109
      %p112 = scmp.ne.s32.totalorder %s95, %s111
      %p113 = scmp.eq.s32.totalorder %s19, 0
      %p114 = por %p112, %p113
      %s115 = ssub.s32 %s13, %s20
      %p116 = scmp.eq.s32.totalorder %s115, 0
      %s118 = sadd.s32 %s117, 1
      %s119 = scalar_select %p116, %s117, %s118
      %p122 = pneg %p116
      %p123 = scmp.eq.s32.totalorder %s13, 1
      %p124 = por %p122, %p123
      %p125 = scmp.ne.s32.totalorder %s117, %s120
      %p126 = scmp.eq.s32.totalorder %s13, 0
      %p127 = por %p125, %p126
      %p128 = scmp.ne.s32.totalorder %s117, %s120
      %p129 = scmp.eq.s32.totalorder %s18, 1
      %p130 = por %p128, %p129
      %p131 = scmp.ne.s32.totalorder %s120, %s121
      %p132 = scmp.eq.s32.totalorder %s18, 0
      %p133 = por %p131, %p132
      %p134 = scmp.ne.s32.totalorder %s120, %s121
      %p135 = scmp.eq.s32.totalorder %s19, 1
      %p136 = por %p134, %p135
      %p138 = scmp.ne.s32.totalorder %s121, %s137
      %p139 = scmp.eq.s32.totalorder %s19, 0
      %p140 = por %p138, %p139
      %p141 = scmp.le.s32.totalorder 1, %s13
      %p142 = scmp.lt.s32.totalorder %s13, 3
      %p143 = pnand %p141, %p142
      %p144 = pneg %p143
      // Predicated region
      $region9: #{tpu_custom_call.1} parent=5 // pred_check
        _
      $region10: #{tpu_custom_call.1} parent=5 // pred_check_branch
        %146 = sbr.rel (%p143) target = $region12
      $region11: #{tpu_custom_call.1} parent=5 // pred_region
        %s147 = ssub.s32 %s13, 1
        // Predicated region
        $region13: #{tpu_custom_call.1} parent=11 // pred_check
          %p148 = pneg %p60
        $region14: #{tpu_custom_call.1} parent=11 // pred_check_branch
          %150 = sbr.rel (%p148) target = $region16
        $region15: #{tpu_custom_call.1} parent=11 // pred_region
          _
        $region16: #{tpu_custom_call.1} parent=11 // pred_fallthru
          _
        // Predicated region
        $region17: #{tpu_custom_call.1} parent=11 // pred_check
          %p151 = pneg %p81
        $region18: #{tpu_custom_call.1} parent=11 // pred_check_branch
          %153 = sbr.rel (%p151) target = $region20
        $region19: #{tpu_custom_call.1} parent=11 // pred_region
          _
        $region20: #{tpu_custom_call.1} parent=11 // pred_fallthru
          _
      $region12: #{tpu_custom_call.1} parent=5 // pred_fallthru
        _
      %p154 = scmp.lt.s32.totalorder %s13, 2
      // Predicated region
      $region21: #{tpu_custom_call.1} parent=5 // pred_check
        %p155 = pneg %p154
      $region22: #{tpu_custom_call.1} parent=5 // pred_check_branch
        %157 = sbr.rel (%p155) target = $region24
      $region23: #{tpu_custom_call.1} parent=5 // pred_region
        // Predicated region
        $region25: #{tpu_custom_call.1} parent=23 // pred_check
          %p158 = pneg %p33
        $region26: #{tpu_custom_call.1} parent=23 // pred_check_branch
          %160 = sbr.rel (%p158) target = $region28
        $region27: #{tpu_custom_call.1} parent=23 // pred_region
          %s161 = smul.u32 32, %s13
          %p162 = scmp.lt.s32.totalorder %s161, 63
          %s163 = scalar_select %p162, %s161, 63
          %s164 = smul.addr %s163, 3
          %s165 = smul.addr %s164, 4
          %s166 = scalar_lea.vmem %s0, %s165
          %s167 = smul.u32 32, %s13
        $region28: #{tpu_custom_call.1} parent=23 // pred_fallthru
          _
        // Predicated region
        $region29: #{tpu_custom_call.1} parent=23 // pred_check
          %p168 = pneg %p101
        $region30: #{tpu_custom_call.1} parent=23 // pred_check_branch
          %170 = sbr.rel (%p168) target = $region32
        $region31: #{tpu_custom_call.1} parent=23 // pred_region
          %s171 = smul.u32 32, %s13
          %p172 = scmp.lt.s32.totalorder %s171, 63
          %s173 = scalar_select %p172, %s171, 63
          %s174 = smul.addr %s173, 8
          %s175 = scalar_lea.vmem %s3, %s174
          %s176 = smul.u32 32, %s13
        $region32: #{tpu_custom_call.1} parent=23 // pred_fallthru
          _
      $region24: #{tpu_custom_call.1} parent=5 // pred_fallthru
        _
      %p177 = scmp.le.s32.totalorder 1, %s13
      %p178 = scmp.lt.s32.totalorder %s13, 3
      %p179 = pnand %p177, %p178
      %p180 = pneg %p179
      // Predicated region
      $region33: #{tpu_custom_call.1} parent=5 // pred_check
        _
      $region34: #{tpu_custom_call.1} parent=5 // pred_check_branch
        %182 = sbr.rel (%p179) target = $region36
      $region35: #{tpu_custom_call.1} parent=5 // pred_region
        %s183 = ssub.s32 %s13, 1
        %s184 = smul.u32 32, %s18
        %p185 = scmp.lt.s32.totalorder %s184, 63
        %s186 = scalar_select %p185, %s184, 63
        %s187 = smul.addr %s186, 3
        %s188 = smul.addr %s187, 4
        %s189 = scalar_lea.vmem %s0, %s188
        %p190 = pneg %p39
        %p191 = pneg %p36
        %p192 = pneg %p60
        %p193 = pneg %p57
        %p194 = pneg %p81
        %p195 = pneg %p78
        %s196 = smul.u32 32, %s18
        %p197 = scmp.lt.s32.totalorder %s196, 63
        %s198 = scalar_select %p197, %s196, 63
        %s199 = smul.addr %s198, 8
        %s200 = scalar_lea.vmem %s3, %s199
        %p201 = pneg %p107
        %p202 = pneg %p104
        %p203 = pneg %p133
        %p204 = pneg %p130
        %s205 = sand.u32 %s120, 1
        %s206 = scalar_lea.sflag [#allocation3], %s205
        %s207 = sand.u32 %s120, 1
        %s208 = smul.addr %s207, 256
        %s209 = scalar_lea.vmem [#allocation2], %s208
        %s210 = smul.u32 32, %s18
        %p211 = scmp.lt.s32.totalorder %s210, 63
        %s212 = scalar_select %p211, %s210, 63
        %s213 = smul.addr %s212, 3
        %s214 = smul.addr %s213, 4
        %s215 = scalar_lea.vmem %s0, %s214
        %s216 = smul.u32 32, %s18
        %s217 = smul.u32 32, %s18
        %p218 = scmp.lt.s32.totalorder %s217, 63
        %s219 = scalar_select %p218, %s217, 63
        %s220 = smul.addr %s219, 8
        %s221 = scalar_lea.vmem %s3, %s220
        %s222 = smul.u32 32, %s18
        %s223 = smul.u32 32, %s18
        %v225 = vld [vmem:[%s215] sm:$0xff]
        %v226 = vld [vmem:[%s215 + $0x8] sm:$0xf]
        %v227 = vld [vmem:[%s215 + $0xc] sm:$0xff]
        %v228 = vld [vmem:[%s215 + $0x14] sm:$0xf]
        %v229 = vld [vmem:[%s215 + $0x18] sm:$0xff]
        %v230 = vld [vmem:[%s215 + $0x20] sm:$0xf]
        %v231 = vld [vmem:[%s215 + $0x24] sm:$0xff]
        %v232 = vld [vmem:[%s215 + $0x2c] sm:$0xf]
        %v233 = vld [vmem:[%s215 + $0x30] sm:$0xff]
        %v234 = vld [vmem:[%s215 + $0x38] sm:$0xf]
        %v235 = vld [vmem:[%s215 + $0x3c] sm:$0xff]
        %v236 = vld [vmem:[%s215 + $0x44] sm:$0xf]
        %v237 = vld [vmem:[%s215 + $0x48] sm:$0xff]
        %v238 = vld [vmem:[%s215 + $0x50] sm:$0xf]
        %v239 = vld [vmem:[%s215 + $0x54] sm:$0xff]
        %v240 = vld [vmem:[%s215 + $0x5c] sm:$0xf]
        %v241 = vld [vmem:[%s215 + $0x60] sm:$0xff]
        %v242 = vld [vmem:[%s215 + $0x68] sm:$0xf]
        %v243 = vld [vmem:[%s215 + $0x6c] sm:$0xff]
        %v244 = vld [vmem:[%s215 + $0x74] sm:$0xf]
        %v245 = vld [vmem:[%s215 + $0x78] sm:$0xff]
        %v246 = vld [vmem:[%s215 + $0x80] sm:$0xf]
        %v247 = vld [vmem:[%s215 + $0x84] sm:$0xff]
        %v248 = vld [vmem:[%s215 + $0x8c] sm:$0xf]
        %v249 = vld [vmem:[%s215 + $0x90] sm:$0xff]
        %v250 = vld [vmem:[%s215 + $0x98] sm:$0xf]
        %v251 = vld [vmem:[%s215 + $0x9c] sm:$0xff]
        %v252 = vld [vmem:[%s215 + $0xa4] sm:$0xf]
        %v253 = vld [vmem:[%s215 + $0xa8] sm:$0xff]
        %v254 = vld [vmem:[%s215 + $0xb0] sm:$0xf]
        %v255 = vld [vmem:[%s215 + $0xb4] sm:$0xff]
        %v256 = vld [vmem:[%s215 + $0xbc] sm:$0xf]
        %v257 = vld [vmem:[%s215 + $0xc0] sm:$0xff]
        %v258 = vld [vmem:[%s215 + $0xc8] sm:$0xf]
        %v259 = vld [vmem:[%s215 + $0xcc] sm:$0xff]
        %v260 = vld [vmem:[%s215 + $0xd4] sm:$0xf]
        %v261 = vld [vmem:[%s215 + $0xd8] sm:$0xff]
        %v262 = vld [vmem:[%s215 + $0xe0] sm:$0xf]
        %v263 = vld [vmem:[%s215 + $0xe4] sm:$0xff]
        %v264 = vld [vmem:[%s215 + $0xec] sm:$0xf]
        %v265 = vld [vmem:[%s215 + $0xf0] sm:$0xff]
        %v266 = vld [vmem:[%s215 + $0xf8] sm:$0xf]
        %v267 = vld [vmem:[%s215 + $0xfc] sm:$0xff]
        %v268 = vld [vmem:[%s215 + $0x104] sm:$0xf]
        %v269 = vld [vmem:[%s215 + $0x108] sm:$0xff]
        %v270 = vld [vmem:[%s215 + $0x110] sm:$0xf]
        %v271 = vld [vmem:[%s215 + $0x114] sm:$0xff]
        %v272 = vld [vmem:[%s215 + $0x11c] sm:$0xf]
        %v273 = vld [vmem:[%s215 + $0x120] sm:$0xff]
        %v274 = vld [vmem:[%s215 + $0x128] sm:$0xf]
        %v275 = vld [vmem:[%s215 + $0x12c] sm:$0xff]
        %v276 = vld [vmem:[%s215 + $0x134] sm:$0xf]
        %v277 = vld [vmem:[%s215 + $0x138] sm:$0xff]
        %v278 = vld [vmem:[%s215 + $0x140] sm:$0xf]
        %v279 = vld [vmem:[%s215 + $0x144] sm:$0xff]
        %v280 = vld [vmem:[%s215 + $0x14c] sm:$0xf]
        %v281 = vld [vmem:[%s215 + $0x150] sm:$0xff]
        %v282 = vld [vmem:[%s215 + $0x158] sm:$0xf]
        %v283 = vld [vmem:[%s215 + $0x15c] sm:$0xff]
        %v284 = vld [vmem:[%s215 + $0x164] sm:$0xf]
        %v285 = vld [vmem:[%s215 + $0x168] sm:$0xff]
        %v286 = vld [vmem:[%s215 + $0x170] sm:$0xf]
        %v287 = vld [vmem:[%s215 + $0x174] sm:$0xff]
        %v288 = vld [vmem:[%s215 + $0x17c] sm:$0xf]
        %v289 = vld [vmem:[%s1] sm:$0xf]
        %v290 = vld [vmem:[%s1 + $0x4] sm:$0xf]
        %v291 = vld [vmem:[%s1 + $0x8] sm:$0xf]
        %v292 = vld [vmem:[%s1 + $0xc] sm:$0xf]
        %v293 = vld [vmem:[%s1 + $0x10] sm:$0xf]
        %v294 = vld [vmem:[%s1 + $0x14] sm:$0xf]
        %v295 = vld [vmem:[%s1 + $0x18] sm:$0xf]
        %v296 = vld [vmem:[%s1 + $0x1c] sm:$0xf]
        %v297 = vld [vmem:[%s1 + $0x20] sm:$0xf]
        %v298 = vld [vmem:[%s1 + $0x24] sm:$0xf]
        %v299 = vld [vmem:[%s1 + $0x28] sm:$0xf]
        %v300 = vld [vmem:[%s1 + $0x2c] sm:$0xf]
        %v301 = vld [vmem:[%s1 + $0x30] sm:$0xf]
        %v302 = vld [vmem:[%s1 + $0x34] sm:$0xf]
        %v303 = vld [vmem:[%s1 + $0x38] sm:$0xf]
        %v304 = vld [vmem:[%s1 + $0x3c] sm:$0xf]
        %v305 = vld [vmem:[%s1 + $0x40] sm:$0xf]
        %v306 = vld [vmem:[%s1 + $0x44] sm:$0xf]
        %v307 = vld [vmem:[%s1 + $0x48] sm:$0xf]
        %v308 = vld [vmem:[%s1 + $0x4c] sm:$0xf]
        %v309 = vld [vmem:[%s1 + $0x50] sm:$0xf]
        %v310 = vld [vmem:[%s1 + $0x54] sm:$0xf]
        %v311 = vld [vmem:[%s1 + $0x58] sm:$0xf]
        %v312 = vld [vmem:[%s1 + $0x5c] sm:$0xf]
        %v313 = vld [vmem:[%s1 + $0x60] sm:$0xf]
        %v314 = vld [vmem:[%s1 + $0x64] sm:$0xf]
        %v315 = vld [vmem:[%s1 + $0x68] sm:$0xf]
        %v316 = vld [vmem:[%s1 + $0x6c] sm:$0xf]
        %v317 = vld [vmem:[%s1 + $0x70] sm:$0xf]
        %v318 = vld [vmem:[%s1 + $0x74] sm:$0xf]
        %v319 = vld [vmem:[%s1 + $0x78] sm:$0xf]
        %v320 = vld [vmem:[%s1 + $0x7c] sm:$0xf]
        %v321 = vld [vmem:[%s1 + $0x80] sm:$0xf]
        %v322 = vld [vmem:[%s1 + $0x84] sm:$0xf]
        %v323 = vld [vmem:[%s1 + $0x88] sm:$0xf]
        %v324 = vld [vmem:[%s1 + $0x8c] sm:$0xf]
        %v325 = vld [vmem:[%s1 + $0x90] sm:$0xf]
        %v326 = vld [vmem:[%s1 + $0x94] sm:$0xf]
        %v327 = vld [vmem:[%s1 + $0x98] sm:$0xf]
        %v328 = vld [vmem:[%s1 + $0x9c] sm:$0xf]
        %v329 = vld [vmem:[%s1 + $0xa0] sm:$0x3]
        %v330 = vld [vmem:[%s2] sm:$0x1]
        %v332 = vlaneseq
        %v333 = vshrl.u32 %v332, 7
        %v334 = vsub.s32 0, %v333
        %v335 = vrot.slane %v330, %v334
        %v401 = vunpack.c.l.b16 %v225
        %v402 = vunpack.c.h.b16 %v225
        %v403 = vunpack.c.l.b16 %v226
        %v404 = vunpack.c.l.b16 %v227
        %v405 = vunpack.c.h.b16 %v227
        %v406 = vunpack.c.l.b16 %v228
        %v407 = vunpack.c.l.b16 %v229
        %v408 = vunpack.c.h.b16 %v229
        %v409 = vunpack.c.l.b16 %v230
        %v410 = vunpack.c.l.b16 %v231
        %v411 = vunpack.c.h.b16 %v231
        %v412 = vunpack.c.l.b16 %v232
        %v413 = vunpack.c.l.b16 %v233
        %v414 = vunpack.c.h.b16 %v233
        %v415 = vunpack.c.l.b16 %v234
        %v416 = vunpack.c.l.b16 %v235
        %v417 = vunpack.c.h.b16 %v235
        %v418 = vunpack.c.l.b16 %v236
        %v419 = vunpack.c.l.b16 %v237
        %v420 = vunpack.c.h.b16 %v237
        %v421 = vunpack.c.l.b16 %v238
        %v422 = vunpack.c.l.b16 %v239
        %v423 = vunpack.c.h.b16 %v239
        %v424 = vunpack.c.l.b16 %v240
        %v425 = vunpack.c.l.b16 %v241
        %v426 = vunpack.c.h.b16 %v241
        %v427 = vunpack.c.l.b16 %v242
        %v428 = vunpack.c.l.b16 %v243
        %v429 = vunpack.c.h.b16 %v243
        %v430 = vunpack.c.l.b16 %v244
        %v431 = vunpack.c.l.b16 %v245
        %v432 = vunpack.c.h.b16 %v245
        %v433 = vunpack.c.l.b16 %v246
        %v434 = vunpack.c.l.b16 %v247
        %v435 = vunpack.c.h.b16 %v247
        %v436 = vunpack.c.l.b16 %v248
        %v437 = vunpack.c.l.b16 %v249
        %v438 = vunpack.c.h.b16 %v249
        %v439 = vunpack.c.l.b16 %v250
        %v440 = vunpack.c.l.b16 %v251
        %v441 = vunpack.c.h.b16 %v251
        %v442 = vunpack.c.l.b16 %v252
        %v443 = vunpack.c.l.b16 %v253
        %v444 = vunpack.c.h.b16 %v253
        %v445 = vunpack.c.l.b16 %v254
        %v446 = vunpack.c.l.b16 %v255
        %v447 = vunpack.c.h.b16 %v255
        %v448 = vunpack.c.l.b16 %v256
        %v449 = vunpack.c.l.b16 %v257
        %v450 = vunpack.c.h.b16 %v257
        %v451 = vunpack.c.l.b16 %v258
        %v452 = vunpack.c.l.b16 %v259
        %v453 = vunpack.c.h.b16 %v259
        %v454 = vunpack.c.l.b16 %v260
        %v455 = vunpack.c.l.b16 %v261
        %v456 = vunpack.c.h.b16 %v261
        %v457 = vunpack.c.l.b16 %v262
        %v458 = vunpack.c.l.b16 %v263
        %v459 = vunpack.c.h.b16 %v263
        %v460 = vunpack.c.l.b16 %v264
        %v461 = vunpack.c.l.b16 %v265
        %v462 = vunpack.c.h.b16 %v265
        %v463 = vunpack.c.l.b16 %v266
        %v464 = vunpack.c.l.b16 %v267
        %v465 = vunpack.c.h.b16 %v267
        %v466 = vunpack.c.l.b16 %v268
        %v467 = vunpack.c.l.b16 %v269
        %v468 = vunpack.c.h.b16 %v269
        %v469 = vunpack.c.l.b16 %v270
        %v470 = vunpack.c.l.b16 %v271
        %v471 = vunpack.c.h.b16 %v271
        %v472 = vunpack.c.l.b16 %v272
        %v473 = vunpack.c.l.b16 %v273
        %v474 = vunpack.c.h.b16 %v273
        %v475 = vunpack.c.l.b16 %v274
        %v476 = vunpack.c.l.b16 %v275
        %v477 = vunpack.c.h.b16 %v275
        %v478 = vunpack.c.l.b16 %v276
        %v479 = vunpack.c.l.b16 %v277
        %v480 = vunpack.c.h.b16 %v277
        %v481 = vunpack.c.l.b16 %v278
        %v482 = vunpack.c.l.b16 %v279
        %v483 = vunpack.c.h.b16 %v279
        %v484 = vunpack.c.l.b16 %v280
        %v485 = vunpack.c.l.b16 %v281
        %v486 = vunpack.c.h.b16 %v281
        %v487 = vunpack.c.l.b16 %v282
        %v488 = vunpack.c.l.b16 %v283
        %v489 = vunpack.c.h.b16 %v283
        %v490 = vunpack.c.l.b16 %v284
        %v491 = vunpack.c.l.b16 %v285
        %v492 = vunpack.c.h.b16 %v285
        %v493 = vunpack.c.l.b16 %v286
        %v494 = vunpack.c.l.b16 %v287
        %v495 = vunpack.c.h.b16 %v287
        %v496 = vunpack.c.l.b16 %v288
        %v497 = vpack.c.b16 %v404, %v401
        %v498 = vpack.c.b16 %v405, %v402
        %v499 = vpack.c.b16 %v406, %v403
        %v500 = vpack.c.b16 %v410, %v407
        %v501 = vpack.c.b16 %v411, %v408
        %v502 = vpack.c.b16 %v412, %v409
        %v503 = vpack.c.b16 %v416, %v413
        %v504 = vpack.c.b16 %v417, %v414
        %v505 = vpack.c.b16 %v418, %v415
        %v506 = vpack.c.b16 %v422, %v419
        %v507 = vpack.c.b16 %v423, %v420
        %v508 = vpack.c.b16 %v424, %v421
        %v509 = vpack.c.b16 %v428, %v425
        %v510 = vpack.c.b16 %v429, %v426
        %v511 = vpack.c.b16 %v430, %v427
        %v512 = vpack.c.b16 %v434, %v431
        %v513 = vpack.c.b16 %v435, %v432
        %v514 = vpack.c.b16 %v436, %v433
        %v515 = vpack.c.b16 %v440, %v437
        %v516 = vpack.c.b16 %v441, %v438
        %v517 = vpack.c.b16 %v442, %v439
        %v518 = vpack.c.b16 %v446, %v443
        %v519 = vpack.c.b16 %v447, %v444
        %v520 = vpack.c.b16 %v448, %v445
        %v521 = vpack.c.b16 %v452, %v449
        %v522 = vpack.c.b16 %v453, %v450
        %v523 = vpack.c.b16 %v454, %v451
        %v524 = vpack.c.b16 %v458, %v455
        %v525 = vpack.c.b16 %v459, %v456
        %v526 = vpack.c.b16 %v460, %v457
        %v527 = vpack.c.b16 %v464, %v461
        %v528 = vpack.c.b16 %v465, %v462
        %v529 = vpack.c.b16 %v466, %v463
        %v530 = vpack.c.b16 %v470, %v467
        %v531 = vpack.c.b16 %v471, %v468
        %v532 = vpack.c.b16 %v472, %v469
        %v533 = vpack.c.b16 %v476, %v473
        %v534 = vpack.c.b16 %v477, %v474
        %v535 = vpack.c.b16 %v478, %v475
        %v536 = vpack.c.b16 %v482, %v479
        %v537 = vpack.c.b16 %v483, %v480
        %v538 = vpack.c.b16 %v484, %v481
        %v539 = vpack.c.b16 %v488, %v485
        %v540 = vpack.c.b16 %v489, %v486
        %v541 = vpack.c.b16 %v490, %v487
        %v542 = vpack.c.b16 %v494, %v491
        %v543 = vpack.c.b16 %v495, %v492
        %v544 = vpack.c.b16 %v496, %v493
        %v618 = vunpack.c.l.b16 %v289
        %v619 = vunpack.c.l.b16 %v290
        %v620 = vunpack.c.l.b16 %v291
        %v621 = vunpack.c.l.b16 %v292
        %v622 = vunpack.c.l.b16 %v293
        %v623 = vunpack.c.l.b16 %v294
        %v624 = vunpack.c.l.b16 %v295
        %v625 = vunpack.c.l.b16 %v296
        %v626 = vunpack.c.l.b16 %v297
        %v627 = vunpack.c.l.b16 %v298
        %v628 = vunpack.c.l.b16 %v299
        %v629 = vunpack.c.l.b16 %v300
        %v630 = vunpack.c.l.b16 %v301
        %v631 = vunpack.c.l.b16 %v302
        %v632 = vunpack.c.l.b16 %v303
        %v633 = vunpack.c.l.b16 %v304
        %v634 = vunpack.c.l.b16 %v305
        %v635 = vunpack.c.l.b16 %v306
        %v636 = vunpack.c.l.b16 %v307
        %v637 = vunpack.c.l.b16 %v308
        %v638 = vunpack.c.l.b16 %v309
        %v639 = vunpack.c.l.b16 %v310
        %v640 = vunpack.c.l.b16 %v311
        %v641 = vunpack.c.l.b16 %v312
        %v642 = vunpack.c.l.b16 %v313
        %v643 = vunpack.c.l.b16 %v314
        %v644 = vunpack.c.l.b16 %v315
        %v645 = vunpack.c.l.b16 %v316
        %v646 = vunpack.c.l.b16 %v317
        %v647 = vunpack.c.l.b16 %v318
        %v648 = vunpack.c.l.b16 %v319
        %v649 = vunpack.c.l.b16 %v320
        %v650 = vunpack.c.l.b16 %v321
        %v651 = vunpack.c.l.b16 %v322
        %v652 = vunpack.c.l.b16 %v323
        %v653 = vunpack.c.l.b16 %v324
        %v654 = vunpack.c.l.b16 %v325
        %v655 = vunpack.c.l.b16 %v326
        %v656 = vunpack.c.l.b16 %v327
        %v657 = vunpack.c.l.b16 %v328
        %v658 = vunpack.c.l.b16 %v329
        %v659 = vpack.c.b16 %v619, %v618
        %v660 = vpack.c.b16 %v621, %v620
        %v661 = vpack.c.b16 %v623, %v622
        %v662 = vpack.c.b16 %v625, %v624
        %v663 = vpack.c.b16 %v627, %v626
        %v664 = vpack.c.b16 %v629, %v628
        %v665 = vpack.c.b16 %v631, %v630
        %v666 = vpack.c.b16 %v633, %v632
        %v667 = vpack.c.b16 %v635, %v634
        %v668 = vpack.c.b16 %v637, %v636
        %v669 = vpack.c.b16 %v639, %v638
        %v670 = vpack.c.b16 %v641, %v640
        %v671 = vpack.c.b16 %v643, %v642
        %v672 = vpack.c.b16 %v645, %v644
        %v673 = vpack.c.b16 %v647, %v646
        %v674 = vpack.c.b16 %v649, %v648
        %v675 = vpack.c.b16 %v651, %v650
        %v676 = vpack.c.b16 %v653, %v652
        %v677 = vpack.c.b16 %v655, %v654
        %v678 = vpack.c.b16 %v657, %v656
        %v679 = vpack.c.b16 %v658, %v658
        %vm700 = vcmask 556032
        %v702 = vsel %vm700, %v499, 0
        %v705 = vsel %vm700, %v502, 0
        %v708 = vsel %vm700, %v505, 0
        %v711 = vsel %vm700, %v508, 0
        %v714 = vsel %vm700, %v511, 0
        %v717 = vsel %vm700, %v514, 0
        %v720 = vsel %vm700, %v517, 0
        %v723 = vsel %vm700, %v520, 0
        %v726 = vsel %vm700, %v523, 0
        %v729 = vsel %vm700, %v526, 0
        %v732 = vsel %vm700, %v529, 0
        %v735 = vsel %vm700, %v532, 0
        %v738 = vsel %vm700, %v535, 0
        %v741 = vsel %vm700, %v538, 0
        %v744 = vsel %vm700, %v541, 0
        %v747 = vsel %vm700, %v544, 0
        %vm749 = vcmask 1041408
        %v751 = vsel %vm749, %v679, 0
        %753 = vmatprep.subr.bf16.mxu0 0
        %754 = vmatpush1.bf16.msra.mxu0 %v666
        %755 = vmatprep.subr.bf16.mxu0 0
        %756 = vmatpush1.bf16.msra.mxu0 %v665
        %757 = vmatprep.subr.bf16.mxu0 0
        %758 = vmatpush1.bf16.msra.mxu0 %v664
        %759 = vmatprep.subr.bf16.mxu0 0
        %760 = vmatpush1.bf16.msra.mxu0 %v663
        %761 = vmatprep.subr.bf16.mxu0 0
        %762 = vmatpush1.bf16.msra.mxu0 %v662
        %763 = vmatprep.subr.bf16.mxu0 0
        %764 = vmatpush1.bf16.msra.mxu0 %v661
        %765 = vmatprep.subr.bf16.mxu0 0
        %766 = vmatpush1.bf16.msra.mxu0 %v660
        %767 = vmatprep.subr.bf16.mxu0 0
        %768 = vmatpush1.bf16.msra.mxu0 %v659
        %769 = vmatprep.subr.bf16.mxu0 0
        %770 = vmatpush2.bf16.msra.mxu0 %v674
        %771 = vmatprep.subr.bf16.mxu0 0
        %772 = vmatpush2.bf16.msra.mxu0 %v673
        %773 = vmatprep.subr.bf16.mxu0 0
        %774 = vmatpush2.bf16.msra.mxu0 %v672
        %775 = vmatprep.subr.bf16.mxu0 0
        %776 = vmatpush2.bf16.msra.mxu0 %v671
        %777 = vmatprep.subr.bf16.mxu0 0
        %778 = vmatpush2.bf16.msra.mxu0 %v670
        %779 = vmatprep.subr.bf16.mxu0 0
        %780 = vmatpush2.bf16.msra.mxu0 %v669
        %781 = vmatprep.subr.bf16.mxu0 0
        %782 = vmatpush2.bf16.msra.mxu0 %v668
        %783 = vmatprep.subr.bf16.mxu0 0
        %784 = vmatpush2.bf16.msra.mxu0 %v667
        %785 = vmatprep.mubr.bf16.mxu0 %v498
        %786 = vmatmul.mubr.bf16.gmra.mxu0 %v497
        %v787 = vpop.f32.mrf.mxu0
        %v788 = vadd.f32 %v335, %v787
        %v789 = vpop.f32.mrf.mxu0
        %v790 = vpop.f32.mrf.mxu0
        %v791 = vadd.f32 %v335, %v790
        %v792 = vpop.f32.mrf.mxu0
        %793 = vmatprep.mubr.bf16.mxu0 %v501
        %794 = vmatmul.mubr.bf16.gmra.mxu0 %v500
        %v795 = vpop.f32.mrf.mxu0
        %v796 = vadd.f32 %v335, %v795
        %v797 = vpop.f32.mrf.mxu0
        %v798 = vpop.f32.mrf.mxu0
        %v799 = vadd.f32 %v335, %v798
        %v800 = vpop.f32.mrf.mxu0
        %801 = vmatprep.mubr.bf16.mxu0 %v504
        %802 = vmatmul.mubr.bf16.gmra.mxu0 %v503
        %v803 = vpop.f32.mrf.mxu0
        %v804 = vadd.f32 %v335, %v803
        %v805 = vpop.f32.mrf.mxu0
        %v806 = vpop.f32.mrf.mxu0
        %v807 = vadd.f32 %v335, %v806
        %v808 = vpop.f32.mrf.mxu0
        %809 = vmatprep.mubr.bf16.mxu0 %v507
        %810 = vmatmul.mubr.bf16.gmra.mxu0 %v506
        %v811 = vpop.f32.mrf.mxu0
        %v812 = vadd.f32 %v335, %v811
        %v813 = vpop.f32.mrf.mxu0
        %v814 = vpop.f32.mrf.mxu0
        %v815 = vadd.f32 %v335, %v814
        %v816 = vpop.f32.mrf.mxu0
        %817 = vmatprep.mubr.bf16.mxu0 %v510
        %818 = vmatmul.mubr.bf16.gmra.mxu0 %v509
        %v819 = vpop.f32.mrf.mxu0
        %v820 = vadd.f32 %v335, %v819
        %v821 = vpop.f32.mrf.mxu0
        %v822 = vpop.f32.mrf.mxu0
        %v823 = vadd.f32 %v335, %v822
        %v824 = vpop.f32.mrf.mxu0
        %825 = vmatprep.mubr.bf16.mxu0 %v513
        %826 = vmatmul.mubr.bf16.gmra.mxu0 %v512
        %v827 = vpop.f32.mrf.mxu0
        %v828 = vadd.f32 %v335, %v827
        %v829 = vpop.f32.mrf.mxu0
        %v830 = vpop.f32.mrf.mxu0
        %v831 = vadd.f32 %v335, %v830
        %v832 = vpop.f32.mrf.mxu0
        %833 = vmatprep.mubr.bf16.mxu0 %v516
        %834 = vmatmul.mubr.bf16.gmra.mxu0 %v515
        %v835 = vpop.f32.mrf.mxu0
        %v836 = vadd.f32 %v335, %v835
        %v837 = vpop.f32.mrf.mxu0
        %v838 = vpop.f32.mrf.mxu0
        %v839 = vadd.f32 %v335, %v838
        %v840 = vpop.f32.mrf.mxu0
        %841 = vmatprep.mubr.bf16.mxu0 %v519
        %842 = vmatmul.mubr.bf16.gmra.mxu0 %v518
        %v843 = vpop.f32.mrf.mxu0
        %v844 = vadd.f32 %v335, %v843
        %v845 = vpop.f32.mrf.mxu0
        %v846 = vpop.f32.mrf.mxu0
        %v847 = vadd.f32 %v335, %v846
        %v848 = vpop.f32.mrf.mxu0
        %849 = vmatprep.mubr.bf16.mxu0 %v522
        %850 = vmatmul.mubr.bf16.gmra.mxu0 %v521
        %v851 = vpop.f32.mrf.mxu0
        %v852 = vadd.f32 %v335, %v851
        %v853 = vpop.f32.mrf.mxu0
        %v854 = vpop.f32.mrf.mxu0
        %v855 = vadd.f32 %v335, %v854
        %v856 = vpop.f32.mrf.mxu0
        %857 = vmatprep.mubr.bf16.mxu0 %v525
        %858 = vmatmul.mubr.bf16.gmra.mxu0 %v524
        %v859 = vpop.f32.mrf.mxu0
        %v860 = vadd.f32 %v335, %v859
        %v861 = vpop.f32.mrf.mxu0
        %v862 = vpop.f32.mrf.mxu0
        %v863 = vadd.f32 %v335, %v862
        %v864 = vpop.f32.mrf.mxu0
        %865 = vmatprep.mubr.bf16.mxu0 %v528
        %866 = vmatmul.mubr.bf16.gmra.mxu0 %v527
        %v867 = vpop.f32.mrf.mxu0
        %v868 = vadd.f32 %v335, %v867
        %v869 = vpop.f32.mrf.mxu0
        %v870 = vpop.f32.mrf.mxu0
        %v871 = vadd.f32 %v335, %v870
        %v872 = vpop.f32.mrf.mxu0
        %873 = vmatprep.mubr.bf16.mxu0 %v531
        %874 = vmatmul.mubr.bf16.gmra.mxu0 %v530
        %v875 = vpop.f32.mrf.mxu0
        %v876 = vadd.f32 %v335, %v875
        %v877 = vpop.f32.mrf.mxu0
        %v878 = vpop.f32.mrf.mxu0
        %v879 = vadd.f32 %v335, %v878
        %v880 = vpop.f32.mrf.mxu0
        %881 = vmatprep.mubr.bf16.mxu0 %v534
        %882 = vmatmul.mubr.bf16.gmra.mxu0 %v533
        %v883 = vpop.f32.mrf.mxu0
        %v884 = vadd.f32 %v335, %v883
        %v885 = vpop.f32.mrf.mxu0
        %v886 = vpop.f32.mrf.mxu0
        %v887 = vadd.f32 %v335, %v886
        %v888 = vpop.f32.mrf.mxu0
        %889 = vmatprep.mubr.bf16.mxu0 %v537
        %890 = vmatmul.mubr.bf16.gmra.mxu0 %v536
        %v891 = vpop.f32.mrf.mxu0
        %v892 = vadd.f32 %v335, %v891
        %v893 = vpop.f32.mrf.mxu0
        %v894 = vpop.f32.mrf.mxu0
        %v895 = vadd.f32 %v335, %v894
        %v896 = vpop.f32.mrf.mxu0
        %897 = vmatprep.mubr.bf16.mxu0 %v540
        %898 = vmatmul.mubr.bf16.gmra.mxu0 %v539
        %v899 = vpop.f32.mrf.mxu0
        %v900 = vadd.f32 %v335, %v899
        %v901 = vpop.f32.mrf.mxu0
        %v902 = vpop.f32.mrf.mxu0
        %v903 = vadd.f32 %v335, %v902
        %v904 = vpop.f32.mrf.mxu0
        %905 = vmatprep.mubr.bf16.mxu0 %v543
        %906 = vmatmul.mubr.bf16.gmra.mxu0 %v542
        %v907 = vpop.f32.mrf.mxu0
        %v908 = vadd.f32 %v335, %v907
        %v909 = vpop.f32.mrf.mxu0
        %v910 = vpop.f32.mrf.mxu0
        %v911 = vadd.f32 %v335, %v910
        %v912 = vpop.f32.mrf.mxu0
        %913 = vdwg.mxu0
        %914 = vmatprep.subr.bf16.mxu0 0
        %915 = vmatpush1.bf16.msra.mxu0 0
        %916 = vmatprep.subr.bf16.mxu0 0
        %917 = vmatpush1.bf16.msra.mxu0 0
        %918 = vmatprep.subr.bf16.mxu0 0
        %919 = vmatpush1.bf16.msra.mxu0 0
        %920 = vmatprep.subr.bf16.mxu0 0
        %921 = vmatpush1.bf16.msra.mxu0 %v751
        %922 = vmatprep.subr.bf16.mxu0 0
        %923 = vmatpush1.bf16.msra.mxu0 %v678
        %924 = vmatprep.subr.bf16.mxu0 0
        %925 = vmatpush1.bf16.msra.mxu0 %v677
        %926 = vmatprep.subr.bf16.mxu0 0
        %927 = vmatpush1.bf16.msra.mxu0 %v676
        %928 = vmatprep.subr.bf16.mxu0 0
        %929 = vmatpush1.bf16.msra.mxu0 %v675
        %930 = vmatprep.subr.bf16.mxu0 0
        %931 = vmatpush2.bf16.msra.mxu0 0
        %932 = vmatprep.subr.bf16.mxu0 0
        %933 = vmatpush2.bf16.msra.mxu0 0
        %934 = vmatprep.subr.bf16.mxu0 0
        %935 = vmatpush2.bf16.msra.mxu0 0
        %936 = vmatprep.subr.bf16.mxu0 0
        %937 = vmatpush2.bf16.msra.mxu0 0
        %938 = vmatprep.subr.bf16.mxu0 0
        %939 = vmatpush2.bf16.msra.mxu0 0
        %940 = vmatprep.subr.bf16.mxu0 0
        %941 = vmatpush2.bf16.msra.mxu0 0
        %942 = vmatprep.subr.bf16.mxu0 0
        %943 = vmatpush2.bf16.msra.mxu0 0
        %944 = vmatprep.subr.bf16.mxu0 0
        %945 = vmatpush2.bf16.msra.mxu0 0
        %946 = vmatprep.mubr.bf16.mxu0 0
        %947 = vmatmul.mubr.bf16.gmra.mxu0 %v702
        %v948 = vpop.f32.mrf.mxu0
        %v949 = vadd.f32 %v788, %v948
        %v950 = vpop.f32.mrf.mxu0
        %v951 = vpop.f32.mrf.mxu0
        %v952 = vadd.f32 %v791, %v951
        %v953 = vpop.f32.mrf.mxu0
        %954 = vmatprep.mubr.bf16.mxu0 0
        %955 = vmatmul.mubr.bf16.gmra.mxu0 %v705
        %v956 = vpop.f32.mrf.mxu0
        %v957 = vadd.f32 %v796, %v956
        %v958 = vpop.f32.mrf.mxu0
        %v959 = vpop.f32.mrf.mxu0
        %v960 = vadd.f32 %v799, %v959
        %v961 = vpop.f32.mrf.mxu0
        %962 = vmatprep.mubr.bf16.mxu0 0
        %963 = vmatmul.mubr.bf16.gmra.mxu0 %v708
        %v964 = vpop.f32.mrf.mxu0
        %v965 = vadd.f32 %v804, %v964
        %v966 = vpop.f32.mrf.mxu0
        %v967 = vpop.f32.mrf.mxu0
        %v968 = vadd.f32 %v807, %v967
        %v969 = vpop.f32.mrf.mxu0
        %970 = vmatprep.mubr.bf16.mxu0 0
        %971 = vmatmul.mubr.bf16.gmra.mxu0 %v711
        %v972 = vpop.f32.mrf.mxu0
        %v973 = vadd.f32 %v812, %v972
        %v974 = vpop.f32.mrf.mxu0
        %v975 = vpop.f32.mrf.mxu0
        %v976 = vadd.f32 %v815, %v975
        %v977 = vpop.f32.mrf.mxu0
        %978 = vmatprep.mubr.bf16.mxu0 0
        %979 = vmatmul.mubr.bf16.gmra.mxu0 %v714
        %v980 = vpop.f32.mrf.mxu0
        %v981 = vadd.f32 %v820, %v980
        %v982 = vpop.f32.mrf.mxu0
        %v983 = vpop.f32.mrf.mxu0
        %v984 = vadd.f32 %v823, %v983
        %v985 = vpop.f32.mrf.mxu0
        %986 = vmatprep.mubr.bf16.mxu0 0
        %987 = vmatmul.mubr.bf16.gmra.mxu0 %v717
        %v988 = vpop.f32.mrf.mxu0
        %v989 = vadd.f32 %v828, %v988
        %v990 = vpop.f32.mrf.mxu0
        %v991 = vpop.f32.mrf.mxu0
        %v992 = vadd.f32 %v831, %v991
        %v993 = vpop.f32.mrf.mxu0
        %994 = vmatprep.mubr.bf16.mxu0 0
        %995 = vmatmul.mubr.bf16.gmra.mxu0 %v720
        %v996 = vpop.f32.mrf.mxu0
        %v997 = vadd.f32 %v836, %v996
        %v998 = vpop.f32.mrf.mxu0
        %v999 = vpop.f32.mrf.mxu0
        %v1000 = vadd.f32 %v839, %v999
        %v1001 = vpop.f32.mrf.mxu0
        %1002 = vmatprep.mubr.bf16.mxu0 0
        %1003 = vmatmul.mubr.bf16.gmra.mxu0 %v723
        %v1004 = vpop.f32.mrf.mxu0
        %v1005 = vadd.f32 %v844, %v1004
        %v1006 = vpop.f32.mrf.mxu0
        %v1007 = vpop.f32.mrf.mxu0
        %v1008 = vadd.f32 %v847, %v1007
        %v1009 = vpop.f32.mrf.mxu0
        %1010 = vmatprep.mubr.bf16.mxu0 0
        %1011 = vmatmul.mubr.bf16.gmra.mxu0 %v726
        %v1012 = vpop.f32.mrf.mxu0
        %v1013 = vadd.f32 %v852, %v1012
        %v1014 = vpop.f32.mrf.mxu0
        %v1015 = vpop.f32.mrf.mxu0
        %v1016 = vadd.f32 %v855, %v1015
        %v1017 = vpop.f32.mrf.mxu0
        %1018 = vmatprep.mubr.bf16.mxu0 0
        %1019 = vmatmul.mubr.bf16.gmra.mxu0 %v729
        %v1020 = vpop.f32.mrf.mxu0
        %v1021 = vadd.f32 %v860, %v1020
        %v1022 = vpop.f32.mrf.mxu0
        %v1023 = vpop.f32.mrf.mxu0
        %v1024 = vadd.f32 %v863, %v1023
        %v1025 = vpop.f32.mrf.mxu0
        %1026 = vmatprep.mubr.bf16.mxu0 0
        %1027 = vmatmul.mubr.bf16.gmra.mxu0 %v732
        %v1028 = vpop.f32.mrf.mxu0
        %v1029 = vadd.f32 %v868, %v1028
        %v1030 = vpop.f32.mrf.mxu0
        %v1031 = vpop.f32.mrf.mxu0
        %v1032 = vadd.f32 %v871, %v1031
        %v1033 = vpop.f32.mrf.mxu0
        %1034 = vmatprep.mubr.bf16.mxu0 0
        %1035 = vmatmul.mubr.bf16.gmra.mxu0 %v735
        %v1036 = vpop.f32.mrf.mxu0
        %v1037 = vadd.f32 %v876, %v1036
        %v1038 = vpop.f32.mrf.mxu0
        %v1039 = vpop.f32.mrf.mxu0
        %v1040 = vadd.f32 %v879, %v1039
        %v1041 = vpop.f32.mrf.mxu0
        %1042 = vmatprep.mubr.bf16.mxu0 0
        %1043 = vmatmul.mubr.bf16.gmra.mxu0 %v738
        %v1044 = vpop.f32.mrf.mxu0
        %v1045 = vadd.f32 %v884, %v1044
        %v1046 = vpop.f32.mrf.mxu0
        %v1047 = vpop.f32.mrf.mxu0
        %v1048 = vadd.f32 %v887, %v1047
        %v1049 = vpop.f32.mrf.mxu0
        %1050 = vmatprep.mubr.bf16.mxu0 0
        %1051 = vmatmul.mubr.bf16.gmra.mxu0 %v741
        %v1052 = vpop.f32.mrf.mxu0
        %v1053 = vadd.f32 %v892, %v1052
        %v1054 = vpop.f32.mrf.mxu0
        %v1055 = vpop.f32.mrf.mxu0
        %v1056 = vadd.f32 %v895, %v1055
        %v1057 = vpop.f32.mrf.mxu0
        %1058 = vmatprep.mubr.bf16.mxu0 0
        %1059 = vmatmul.mubr.bf16.gmra.mxu0 %v744
        %v1060 = vpop.f32.mrf.mxu0
        %v1061 = vadd.f32 %v900, %v1060
        %v1062 = vpop.f32.mrf.mxu0
        %v1063 = vpop.f32.mrf.mxu0
        %v1064 = vadd.f32 %v903, %v1063
        %v1065 = vpop.f32.mrf.mxu0
        %1066 = vmatprep.mubr.bf16.mxu0 0
        %1067 = vmatmul.mubr.bf16.gmra.mxu0 %v747
        %v1068 = vpop.f32.mrf.mxu0
        %v1069 = vadd.f32 %v908, %v1068
        %v1070 = vpop.f32.mrf.mxu0
        %v1071 = vpop.f32.mrf.mxu0
        %v1072 = vadd.f32 %v911, %v1071
        %v1073 = vpop.f32.mrf.mxu0
        %1074 = vdwg.mxu0
        %v1075 = vld [vmem:[%s221] sm:$0xff]
        %v1076 = vld [vmem:[%s221 + $0x8] sm:$0xff]
        %v1077 = vld [vmem:[%s221 + $0x10] sm:$0xff]
        %v1078 = vld [vmem:[%s221 + $0x18] sm:$0xff]
        %v1079 = vld [vmem:[%s221 + $0x20] sm:$0xff]
        %v1080 = vld [vmem:[%s221 + $0x28] sm:$0xff]
        %v1081 = vld [vmem:[%s221 + $0x30] sm:$0xff]
        %v1082 = vld [vmem:[%s221 + $0x38] sm:$0xff]
        %v1083 = vld [vmem:[%s221 + $0x40] sm:$0xff]
        %v1084 = vld [vmem:[%s221 + $0x48] sm:$0xff]
        %v1085 = vld [vmem:[%s221 + $0x50] sm:$0xff]
        %v1086 = vld [vmem:[%s221 + $0x58] sm:$0xff]
        %v1087 = vld [vmem:[%s221 + $0x60] sm:$0xff]
        %v1088 = vld [vmem:[%s221 + $0x68] sm:$0xff]
        %v1089 = vld [vmem:[%s221 + $0x70] sm:$0xff]
        %v1090 = vld [vmem:[%s221 + $0x78] sm:$0xff]
        %v1091 = vld [vmem:[%s221 + $0x80] sm:$0xff]
        %v1092 = vld [vmem:[%s221 + $0x88] sm:$0xff]
        %v1093 = vld [vmem:[%s221 + $0x90] sm:$0xff]
        %v1094 = vld [vmem:[%s221 + $0x98] sm:$0xff]
        %v1095 = vld [vmem:[%s221 + $0xa0] sm:$0xff]
        %v1096 = vld [vmem:[%s221 + $0xa8] sm:$0xff]
        %v1097 = vld [vmem:[%s221 + $0xb0] sm:$0xff]
        %v1098 = vld [vmem:[%s221 + $0xb8] sm:$0xff]
        %v1099 = vld [vmem:[%s221 + $0xc0] sm:$0xff]
        %v1100 = vld [vmem:[%s221 + $0xc8] sm:$0xff]
        %v1101 = vld [vmem:[%s221 + $0xd0] sm:$0xff]
        %v1102 = vld [vmem:[%s221 + $0xd8] sm:$0xff]
        %v1103 = vld [vmem:[%s221 + $0xe0] sm:$0xff]
        %v1104 = vld [vmem:[%s221 + $0xe8] sm:$0xff]
        %v1105 = vld [vmem:[%s221 + $0xf0] sm:$0xff]
        %v1106 = vld [vmem:[%s221 + $0xf8] sm:$0xff]
        %1139 = vrot.lane.b32.xlu0 %v1075, 32
        %v1140 = vpop.permute.xlu0 %1139
        %1141 = vrot.lane.b32.xlu0 %v1076, 32
        %v1142 = vpop.permute.xlu0 %1141
        %1143 = vrot.lane.b32.xlu0 %v1077, 32
        %v1144 = vpop.permute.xlu0 %1143
        %1145 = vrot.lane.b32.xlu0 %v1078, 32
        %v1146 = vpop.permute.xlu0 %1145
        %1147 = vrot.lane.b32.xlu0 %v1079, 32
        %v1148 = vpop.permute.xlu0 %1147
        %1149 = vrot.lane.b32.xlu0 %v1080, 32
        %v1150 = vpop.permute.xlu0 %1149
        %1151 = vrot.lane.b32.xlu0 %v1081, 32
        %v1152 = vpop.permute.xlu0 %1151
        %1153 = vrot.lane.b32.xlu0 %v1082, 32
        %v1154 = vpop.permute.xlu0 %1153
        %1155 = vrot.lane.b32.xlu0 %v1083, 32
        %v1156 = vpop.permute.xlu0 %1155
        %1157 = vrot.lane.b32.xlu0 %v1084, 32
        %v1158 = vpop.permute.xlu0 %1157
        %1159 = vrot.lane.b32.xlu0 %v1085, 32
        %v1160 = vpop.permute.xlu0 %1159
        %1161 = vrot.lane.b32.xlu0 %v1086, 32
        %v1162 = vpop.permute.xlu0 %1161
        %1163 = vrot.lane.b32.xlu0 %v1087, 32
        %v1164 = vpop.permute.xlu0 %1163
        %1165 = vrot.lane.b32.xlu0 %v1088, 32
        %v1166 = vpop.permute.xlu0 %1165
        %1167 = vrot.lane.b32.xlu0 %v1089, 32
        %v1168 = vpop.permute.xlu0 %1167
        %1169 = vrot.lane.b32.xlu0 %v1090, 32
        %v1170 = vpop.permute.xlu0 %1169
        %1171 = vrot.lane.b32.xlu0 %v1091, 32
        %v1172 = vpop.permute.xlu0 %1171
        %1173 = vrot.lane.b32.xlu0 %v1092, 32
        %v1174 = vpop.permute.xlu0 %1173
        %1175 = vrot.lane.b32.xlu0 %v1093, 32
        %v1176 = vpop.permute.xlu0 %1175
        %1177 = vrot.lane.b32.xlu0 %v1094, 32
        %v1178 = vpop.permute.xlu0 %1177
        %1179 = vrot.lane.b32.xlu0 %v1095, 32
        %v1180 = vpop.permute.xlu0 %1179
        %1181 = vrot.lane.b32.xlu0 %v1096, 32
        %v1182 = vpop.permute.xlu0 %1181
        %1183 = vrot.lane.b32.xlu0 %v1097, 32
        %v1184 = vpop.permute.xlu0 %1183
        %1185 = vrot.lane.b32.xlu0 %v1098, 32
        %v1186 = vpop.permute.xlu0 %1185
        %1187 = vrot.lane.b32.xlu0 %v1099, 32
        %v1188 = vpop.permute.xlu0 %1187
        %1189 = vrot.lane.b32.xlu0 %v1100, 32
        %v1190 = vpop.permute.xlu0 %1189
        %1191 = vrot.lane.b32.xlu0 %v1101, 32
        %v1192 = vpop.permute.xlu0 %1191
        %1193 = vrot.lane.b32.xlu0 %v1102, 32
        %v1194 = vpop.permute.xlu0 %1193
        %1195 = vrot.lane.b32.xlu0 %v1103, 32
        %v1196 = vpop.permute.xlu0 %1195
        %1197 = vrot.lane.b32.xlu0 %v1104, 32
        %v1198 = vpop.permute.xlu0 %1197
        %1199 = vrot.lane.b32.xlu0 %v1105, 32
        %v1200 = vpop.permute.xlu0 %1199
        %1201 = vrot.lane.b32.xlu0 %v1106, 32
        %v1202 = vpop.permute.xlu0 %1201
        %vm1235 = vcmask 261120
        %v1236 = vsel %vm1235, %v1075, %v1140
        %v1237 = vsel %vm1235, %v1076, %v1142
        %v1238 = vsel %vm1235, %v1077, %v1144
        %v1239 = vsel %vm1235, %v1078, %v1146
        %v1240 = vsel %vm1235, %v1079, %v1148
        %v1241 = vsel %vm1235, %v1080, %v1150
        %v1242 = vsel %vm1235, %v1081, %v1152
        %v1243 = vsel %vm1235, %v1082, %v1154
        %v1244 = vsel %vm1235, %v1083, %v1156
        %v1245 = vsel %vm1235, %v1084, %v1158
        %v1246 = vsel %vm1235, %v1085, %v1160
        %v1247 = vsel %vm1235, %v1086, %v1162
        %v1248 = vsel %vm1235, %v1087, %v1164
        %v1249 = vsel %vm1235, %v1088, %v1166
        %v1250 = vsel %vm1235, %v1089, %v1168
        %v1251 = vsel %vm1235, %v1090, %v1170
        %v1252 = vsel %vm1235, %v1091, %v1172
        %v1253 = vsel %vm1235, %v1092, %v1174
        %v1254 = vsel %vm1235, %v1093, %v1176
        %v1255 = vsel %vm1235, %v1094, %v1178
        %v1256 = vsel %vm1235, %v1095, %v1180
        %v1257 = vsel %vm1235, %v1096, %v1182
        %v1258 = vsel %vm1235, %v1097, %v1184
        %v1259 = vsel %vm1235, %v1098, %v1186
        %v1260 = vsel %vm1235, %v1099, %v1188
        %v1261 = vsel %vm1235, %v1100, %v1190
        %v1262 = vsel %vm1235, %v1101, %v1192
        %v1263 = vsel %vm1235, %v1102, %v1194
        %v1264 = vsel %vm1235, %v1103, %v1196
        %v1265 = vsel %vm1235, %v1104, %v1198
        %v1266 = vsel %vm1235, %v1105, %v1200
        %v1267 = vsel %vm1235, %v1106, %v1202
        %1300 = vrot.lane.b32.xlu0 %v1236, 32
        %v1301 = vpop.permute.xlu0 %1300
        %1302 = vrot.lane.b32.xlu0 %v1237, 32
        %v1303 = vpop.permute.xlu0 %1302
        %1304 = vrot.lane.b32.xlu0 %v1238, 32
        %v1305 = vpop.permute.xlu0 %1304
        %1306 = vrot.lane.b32.xlu0 %v1239, 32
        %v1307 = vpop.permute.xlu0 %1306
        %1308 = vrot.lane.b32.xlu0 %v1240, 32
        %v1309 = vpop.permute.xlu0 %1308
        %1310 = vrot.lane.b32.xlu0 %v1241, 32
        %v1311 = vpop.permute.xlu0 %1310
        %1312 = vrot.lane.b32.xlu0 %v1242, 32
        %v1313 = vpop.permute.xlu0 %1312
        %1314 = vrot.lane.b32.xlu0 %v1243, 32
        %v1315 = vpop.permute.xlu0 %1314
        %1316 = vrot.lane.b32.xlu0 %v1244, 32
        %v1317 = vpop.permute.xlu0 %1316
        %1318 = vrot.lane.b32.xlu0 %v1245, 32
        %v1319 = vpop.permute.xlu0 %1318
        %1320 = vrot.lane.b32.xlu0 %v1246, 32
        %v1321 = vpop.permute.xlu0 %1320
        %1322 = vrot.lane.b32.xlu0 %v1247, 32
        %v1323 = vpop.permute.xlu0 %1322
        %1324 = vrot.lane.b32.xlu0 %v1248, 32
        %v1325 = vpop.permute.xlu0 %1324
        %1326 = vrot.lane.b32.xlu0 %v1249, 32
        %v1327 = vpop.permute.xlu0 %1326
        %1328 = vrot.lane.b32.xlu0 %v1250, 32
        %v1329 = vpop.permute.xlu0 %1328
        %1330 = vrot.lane.b32.xlu0 %v1251, 32
        %v1331 = vpop.permute.xlu0 %1330
        %1332 = vrot.lane.b32.xlu0 %v1252, 32
        %v1333 = vpop.permute.xlu0 %1332
        %1334 = vrot.lane.b32.xlu0 %v1253, 32
        %v1335 = vpop.permute.xlu0 %1334
        %1336 = vrot.lane.b32.xlu0 %v1254, 32
        %v1337 = vpop.permute.xlu0 %1336
        %1338 = vrot.lane.b32.xlu0 %v1255, 32
        %v1339 = vpop.permute.xlu0 %1338
        %1340 = vrot.lane.b32.xlu0 %v1256, 32
        %v1341 = vpop.permute.xlu0 %1340
        %1342 = vrot.lane.b32.xlu0 %v1257, 32
        %v1343 = vpop.permute.xlu0 %1342
        %1344 = vrot.lane.b32.xlu0 %v1258, 32
        %v1345 = vpop.permute.xlu0 %1344
        %1346 = vrot.lane.b32.xlu0 %v1259, 32
        %v1347 = vpop.permute.xlu0 %1346
        %1348 = vrot.lane.b32.xlu0 %v1260, 32
        %v1349 = vpop.permute.xlu0 %1348
        %1350 = vrot.lane.b32.xlu0 %v1261, 32
        %v1351 = vpop.permute.xlu0 %1350
        %1352 = vrot.lane.b32.xlu0 %v1262, 32
        %v1353 = vpop.permute.xlu0 %1352
        %1354 = vrot.lane.b32.xlu0 %v1263, 32
        %v1355 = vpop.permute.xlu0 %1354
        %1356 = vrot.lane.b32.xlu0 %v1264, 32
        %v1357 = vpop.permute.xlu0 %1356
        %1358 = vrot.lane.b32.xlu0 %v1265, 32
        %v1359 = vpop.permute.xlu0 %1358
        %1360 = vrot.lane.b32.xlu0 %v1266, 32
        %v1361 = vpop.permute.xlu0 %1360
        %1362 = vrot.lane.b32.xlu0 %v1267, 32
        %v1363 = vpop.permute.xlu0 %1362
        %v1396 = vmul.f32 %v1075, %v1301
        %v1397 = vmul.f32 %v1076, %v1303
        %v1398 = vmul.f32 %v1077, %v1305
        %v1399 = vmul.f32 %v1078, %v1307
        %v1400 = vmul.f32 %v1079, %v1309
        %v1401 = vmul.f32 %v1080, %v1311
        %v1402 = vmul.f32 %v1081, %v1313
        %v1403 = vmul.f32 %v1082, %v1315
        %v1404 = vmul.f32 %v1083, %v1317
        %v1405 = vmul.f32 %v1084, %v1319
        %v1406 = vmul.f32 %v1085, %v1321
        %v1407 = vmul.f32 %v1086, %v1323
        %v1408 = vmul.f32 %v1087, %v1325
        %v1409 = vmul.f32 %v1088, %v1327
        %v1410 = vmul.f32 %v1089, %v1329
        %v1411 = vmul.f32 %v1090, %v1331
        %v1412 = vmul.f32 %v1091, %v1333
        %v1413 = vmul.f32 %v1092, %v1335
        %v1414 = vmul.f32 %v1093, %v1337
        %v1415 = vmul.f32 %v1094, %v1339
        %v1416 = vmul.f32 %v1095, %v1341
        %v1417 = vmul.f32 %v1096, %v1343
        %v1418 = vmul.f32 %v1097, %v1345
        %v1419 = vmul.f32 %v1098, %v1347
        %v1420 = vmul.f32 %v1099, %v1349
        %v1421 = vmul.f32 %v1100, %v1351
        %v1422 = vmul.f32 %v1101, %v1353
        %v1423 = vmul.f32 %v1102, %v1355
        %v1424 = vmul.f32 %v1103, %v1357
        %v1425 = vmul.f32 %v1104, %v1359
        %v1426 = vmul.f32 %v1105, %v1361
        %v1427 = vmul.f32 %v1106, %v1363
        %1460 = vrot.lane.b32.xlu0 %v1396, 96
        %v1461 = vpop.permute.xlu0 %1460
        %1462 = vrot.lane.b32.xlu0 %v1397, 96
        %v1463 = vpop.permute.xlu0 %1462
        %1464 = vrot.lane.b32.xlu0 %v1398, 96
        %v1465 = vpop.permute.xlu0 %1464
        %1466 = vrot.lane.b32.xlu0 %v1399, 96
        %v1467 = vpop.permute.xlu0 %1466
        %1468 = vrot.lane.b32.xlu0 %v1400, 96
        %v1469 = vpop.permute.xlu0 %1468
        %1470 = vrot.lane.b32.xlu0 %v1401, 96
        %v1471 = vpop.permute.xlu0 %1470
        %1472 = vrot.lane.b32.xlu0 %v1402, 96
        %v1473 = vpop.permute.xlu0 %1472
        %1474 = vrot.lane.b32.xlu0 %v1403, 96
        %v1475 = vpop.permute.xlu0 %1474
        %1476 = vrot.lane.b32.xlu0 %v1404, 96
        %v1477 = vpop.permute.xlu0 %1476
        %1478 = vrot.lane.b32.xlu0 %v1405, 96
        %v1479 = vpop.permute.xlu0 %1478
        %1480 = vrot.lane.b32.xlu0 %v1406, 96
        %v1481 = vpop.permute.xlu0 %1480
        %1482 = vrot.lane.b32.xlu0 %v1407, 96
        %v1483 = vpop.permute.xlu0 %1482
        %1484 = vrot.lane.b32.xlu0 %v1408, 96
        %v1485 = vpop.permute.xlu0 %1484
        %1486 = vrot.lane.b32.xlu0 %v1409, 96
        %v1487 = vpop.permute.xlu0 %1486
        %1488 = vrot.lane.b32.xlu0 %v1410, 96
        %v1489 = vpop.permute.xlu0 %1488
        %1490 = vrot.lane.b32.xlu0 %v1411, 96
        %v1491 = vpop.permute.xlu0 %1490
        %1492 = vrot.lane.b32.xlu0 %v1412, 96
        %v1493 = vpop.permute.xlu0 %1492
        %1494 = vrot.lane.b32.xlu0 %v1413, 96
        %v1495 = vpop.permute.xlu0 %1494
        %1496 = vrot.lane.b32.xlu0 %v1414, 96
        %v1497 = vpop.permute.xlu0 %1496
        %1498 = vrot.lane.b32.xlu0 %v1415, 96
        %v1499 = vpop.permute.xlu0 %1498
        %1500 = vrot.lane.b32.xlu0 %v1416, 96
        %v1501 = vpop.permute.xlu0 %1500
        %1502 = vrot.lane.b32.xlu0 %v1417, 96
        %v1503 = vpop.permute.xlu0 %1502
        %1504 = vrot.lane.b32.xlu0 %v1418, 96
        %v1505 = vpop.permute.xlu0 %1504
        %1506 = vrot.lane.b32.xlu0 %v1419, 96
        %v1507 = vpop.permute.xlu0 %1506
        %1508 = vrot.lane.b32.xlu0 %v1420, 96
        %v1509 = vpop.permute.xlu0 %1508
        %1510 = vrot.lane.b32.xlu0 %v1421, 96
        %v1511 = vpop.permute.xlu0 %1510
        %1512 = vrot.lane.b32.xlu0 %v1422, 96
        %v1513 = vpop.permute.xlu0 %1512
        %1514 = vrot.lane.b32.xlu0 %v1423, 96
        %v1515 = vpop.permute.xlu0 %1514
        %1516 = vrot.lane.b32.xlu0 %v1424, 96
        %v1517 = vpop.permute.xlu0 %1516
        %1518 = vrot.lane.b32.xlu0 %v1425, 96
        %v1519 = vpop.permute.xlu0 %1518
        %1520 = vrot.lane.b32.xlu0 %v1426, 96
        %v1521 = vpop.permute.xlu0 %1520
        %1522 = vrot.lane.b32.xlu0 %v1427, 96
        %v1523 = vpop.permute.xlu0 %1522
        %v1556 = vadd.f32 %v949, %v1461
        %v1557 = vadd.f32 %v952, %v1463
        %v1558 = vadd.f32 %v957, %v1465
        %v1559 = vadd.f32 %v960, %v1467
        %v1560 = vadd.f32 %v965, %v1469
        %v1561 = vadd.f32 %v968, %v1471
        %v1562 = vadd.f32 %v973, %v1473
        %v1563 = vadd.f32 %v976, %v1475
        %v1564 = vadd.f32 %v981, %v1477
        %v1565 = vadd.f32 %v984, %v1479
        %v1566 = vadd.f32 %v989, %v1481
        %v1567 = vadd.f32 %v992, %v1483
        %v1568 = vadd.f32 %v997, %v1485
        %v1569 = vadd.f32 %v1000, %v1487
        %v1570 = vadd.f32 %v1005, %v1489
        %v1571 = vadd.f32 %v1008, %v1491
        %v1572 = vadd.f32 %v1013, %v1493
        %v1573 = vadd.f32 %v1016, %v1495
        %v1574 = vadd.f32 %v1021, %v1497
        %v1575 = vadd.f32 %v1024, %v1499
        %v1576 = vadd.f32 %v1029, %v1501
        %v1577 = vadd.f32 %v1032, %v1503
        %v1578 = vadd.f32 %v1037, %v1505
        %v1579 = vadd.f32 %v1040, %v1507
        %v1580 = vadd.f32 %v1045, %v1509
        %v1581 = vadd.f32 %v1048, %v1511
        %v1582 = vadd.f32 %v1053, %v1513
        %v1583 = vadd.f32 %v1056, %v1515
        %v1584 = vadd.f32 %v1061, %v1517
        %v1585 = vadd.f32 %v1064, %v1519
        %v1586 = vadd.f32 %v1069, %v1521
        %v1587 = vadd.f32 %v1072, %v1523
        %v1588 = vxor.u32 %v1556, 2147483648
        %v1589 = vxor.u32 %v1557, 2147483648
        %v1590 = vxor.u32 %v1558, 2147483648
        %v1591 = vxor.u32 %v1559, 2147483648
        %v1592 = vxor.u32 %v1560, 2147483648
        %v1593 = vxor.u32 %v1561, 2147483648
        %v1594 = vxor.u32 %v1562, 2147483648
        %v1595 = vxor.u32 %v1563, 2147483648
        %v1596 = vxor.u32 %v1564, 2147483648
        %v1597 = vxor.u32 %v1565, 2147483648
        %v1598 = vxor.u32 %v1566, 2147483648
        %v1599 = vxor.u32 %v1567, 2147483648
        %v1600 = vxor.u32 %v1568, 2147483648
        %v1601 = vxor.u32 %v1569, 2147483648
        %v1602 = vxor.u32 %v1570, 2147483648
        %v1603 = vxor.u32 %v1571, 2147483648
        %v1604 = vxor.u32 %v1572, 2147483648
        %v1605 = vxor.u32 %v1573, 2147483648
        %v1606 = vxor.u32 %v1574, 2147483648
        %v1607 = vxor.u32 %v1575, 2147483648
        %v1608 = vxor.u32 %v1576, 2147483648
        %v1609 = vxor.u32 %v1577, 2147483648
        %v1610 = vxor.u32 %v1578, 2147483648
        %v1611 = vxor.u32 %v1579, 2147483648
        %v1612 = vxor.u32 %v1580, 2147483648
        %v1613 = vxor.u32 %v1581, 2147483648
        %v1614 = vxor.u32 %v1582, 2147483648
        %v1615 = vxor.u32 %v1583, 2147483648
        %v1616 = vxor.u32 %v1584, 2147483648
        %v1617 = vxor.u32 %v1585, 2147483648
        %v1618 = vxor.u32 %v1586, 2147483648
        %v1619 = vxor.u32 %v1587, 2147483648
        %v1620 = vmul.f32 %v1588, 1.442695
        %v1621 = vpow.pop %v1620
        %v1622 = vmul.f32 %v1589, 1.442695
        %v1623 = vpow.pop %v1622
        %v1624 = vmul.f32 %v1590, 1.442695
        %v1625 = vpow.pop %v1624
        %v1626 = vmul.f32 %v1591, 1.442695
        %v1627 = vpow.pop %v1626
        %v1628 = vmul.f32 %v1592, 1.442695
        %v1629 = vpow.pop %v1628
        %v1630 = vmul.f32 %v1593, 1.442695
        %v1631 = vpow.pop %v1630
        %v1632 = vmul.f32 %v1594, 1.442695
        %v1633 = vpow.pop %v1632
        %v1634 = vmul.f32 %v1595, 1.442695
        %v1635 = vpow.pop %v1634
        %v1636 = vmul.f32 %v1596, 1.442695
        %v1637 = vpow.pop %v1636
        %v1638 = vmul.f32 %v1597, 1.442695
        %v1639 = vpow.pop %v1638
        %v1640 = vmul.f32 %v1598, 1.442695
        %v1641 = vpow.pop %v1640
        %v1642 = vmul.f32 %v1599, 1.442695
        %v1643 = vpow.pop %v1642
        %v1644 = vmul.f32 %v1600, 1.442695
        %v1645 = vpow.pop %v1644
        %v1646 = vmul.f32 %v1601, 1.442695
        %v1647 = vpow.pop %v1646
        %v1648 = vmul.f32 %v1602, 1.442695
        %v1649 = vpow.pop %v1648
        %v1650 = vmul.f32 %v1603, 1.442695
        %v1651 = vpow.pop %v1650
        %v1652 = vmul.f32 %v1604, 1.442695
        %v1653 = vpow.pop %v1652
        %v1654 = vmul.f32 %v1605, 1.442695
        %v1655 = vpow.pop %v1654
        %v1656 = vmul.f32 %v1606, 1.442695
        %v1657 = vpow.pop %v1656
        %v1658 = vmul.f32 %v1607, 1.442695
        %v1659 = vpow.pop %v1658
        %v1660 = vmul.f32 %v1608, 1.442695
        %v1661 = vpow.pop %v1660
        %v1662 = vmul.f32 %v1609, 1.442695
        %v1663 = vpow.pop %v1662
        %v1664 = vmul.f32 %v1610, 1.442695
        %v1665 = vpow.pop %v1664
        %v1666 = vmul.f32 %v1611, 1.442695
        %v1667 = vpow.pop %v1666
        %v1668 = vmul.f32 %v1612, 1.442695
        %v1669 = vpow.pop %v1668
        %v1670 = vmul.f32 %v1613, 1.442695
        %v1671 = vpow.pop %v1670
        %v1672 = vmul.f32 %v1614, 1.442695
        %v1673 = vpow.pop %v1672
        %v1674 = vmul.f32 %v1615, 1.442695
        %v1675 = vpow.pop %v1674
        %v1676 = vmul.f32 %v1616, 1.442695
        %v1677 = vpow.pop %v1676
        %v1678 = vmul.f32 %v1617, 1.442695
        %v1679 = vpow.pop %v1678
        %v1680 = vmul.f32 %v1618, 1.442695
        %v1681 = vpow.pop %v1680
        %v1682 = vmul.f32 %v1619, 1.442695
        %v1683 = vpow.pop %v1682
        %v1684 = vadd.f32 %v1621, 1.0
        %v1685 = vadd.f32 %v1623, 1.0
        %v1686 = vadd.f32 %v1625, 1.0
        %v1687 = vadd.f32 %v1627, 1.0
        %v1688 = vadd.f32 %v1629, 1.0
        %v1689 = vadd.f32 %v1631, 1.0
        %v1690 = vadd.f32 %v1633, 1.0
        %v1691 = vadd.f32 %v1635, 1.0
        %v1692 = vadd.f32 %v1637, 1.0
        %v1693 = vadd.f32 %v1639, 1.0
        %v1694 = vadd.f32 %v1641, 1.0
        %v1695 = vadd.f32 %v1643, 1.0
        %v1696 = vadd.f32 %v1645, 1.0
        %v1697 = vadd.f32 %v1647, 1.0
        %v1698 = vadd.f32 %v1649, 1.0
        %v1699 = vadd.f32 %v1651, 1.0
        %v1700 = vadd.f32 %v1653, 1.0
        %v1701 = vadd.f32 %v1655, 1.0
        %v1702 = vadd.f32 %v1657, 1.0
        %v1703 = vadd.f32 %v1659, 1.0
        %v1704 = vadd.f32 %v1661, 1.0
        %v1705 = vadd.f32 %v1663, 1.0
        %v1706 = vadd.f32 %v1665, 1.0
        %v1707 = vadd.f32 %v1667, 1.0
        %v1708 = vadd.f32 %v1669, 1.0
        %v1709 = vadd.f32 %v1671, 1.0
        %v1710 = vadd.f32 %v1673, 1.0
        %v1711 = vadd.f32 %v1675, 1.0
        %v1712 = vadd.f32 %v1677, 1.0
        %v1713 = vadd.f32 %v1679, 1.0
        %v1714 = vadd.f32 %v1681, 1.0
        %v1715 = vadd.f32 %v1683, 1.0
        %v1716 = vrcp.pop %v1684
        %v1717 = vmul.f32 1.0, %v1716
        %v1718 = vrcp.pop %v1685
        %v1719 = vmul.f32 1.0, %v1718
        %v1720 = vrcp.pop %v1686
        %v1721 = vmul.f32 1.0, %v1720
        %v1722 = vrcp.pop %v1687
        %v1723 = vmul.f32 1.0, %v1722
        %v1724 = vrcp.pop %v1688
        %v1725 = vmul.f32 1.0, %v1724
        %v1726 = vrcp.pop %v1689
        %v1727 = vmul.f32 1.0, %v1726
        %v1728 = vrcp.pop %v1690
        %v1729 = vmul.f32 1.0, %v1728
        %v1730 = vrcp.pop %v1691
        %v1731 = vmul.f32 1.0, %v1730
        %v1732 = vrcp.pop %v1692
        %v1733 = vmul.f32 1.0, %v1732
        %v1734 = vrcp.pop %v1693
        %v1735 = vmul.f32 1.0, %v1734
        %v1736 = vrcp.pop %v1694
        %v1737 = vmul.f32 1.0, %v1736
        %v1738 = vrcp.pop %v1695
        %v1739 = vmul.f32 1.0, %v1738
        %v1740 = vrcp.pop %v1696
        %v1741 = vmul.f32 1.0, %v1740
        %v1742 = vrcp.pop %v1697
        %v1743 = vmul.f32 1.0, %v1742
        %v1744 = vrcp.pop %v1698
        %v1745 = vmul.f32 1.0, %v1744
        %v1746 = vrcp.pop %v1699
        %v1747 = vmul.f32 1.0, %v1746
        %v1748 = vrcp.pop %v1700
        %v1749 = vmul.f32 1.0, %v1748
        %v1750 = vrcp.pop %v1701
        %v1751 = vmul.f32 1.0, %v1750
        %v1752 = vrcp.pop %v1702
        %v1753 = vmul.f32 1.0, %v1752
        %v1754 = vrcp.pop %v1703
        %v1755 = vmul.f32 1.0, %v1754
        %v1756 = vrcp.pop %v1704
        %v1757 = vmul.f32 1.0, %v1756
        %v1758 = vrcp.pop %v1705
        %v1759 = vmul.f32 1.0, %v1758
        %v1760 = vrcp.pop %v1706
        %v1761 = vmul.f32 1.0, %v1760
        %v1762 = vrcp.pop %v1707
        %v1763 = vmul.f32 1.0, %v1762
        %v1764 = vrcp.pop %v1708
        %v1765 = vmul.f32 1.0, %v1764
        %v1766 = vrcp.pop %v1709
        %v1767 = vmul.f32 1.0, %v1766
        %v1768 = vrcp.pop %v1710
        %v1769 = vmul.f32 1.0, %v1768
        %v1770 = vrcp.pop %v1711
        %v1771 = vmul.f32 1.0, %v1770
        %v1772 = vrcp.pop %v1712
        %v1773 = vmul.f32 1.0, %v1772
        %v1774 = vrcp.pop %v1713
        %v1775 = vmul.f32 1.0, %v1774
        %v1776 = vrcp.pop %v1714
        %v1777 = vmul.f32 1.0, %v1776
        %v1778 = vrcp.pop %v1715
        %v1779 = vmul.f32 1.0, %v1778
        %v1780 = vtanh.pop %v949
        %v1781 = vtanh.pop %v952
        %v1782 = vtanh.pop %v957
        %v1783 = vtanh.pop %v960
        %v1784 = vtanh.pop %v965
        %v1785 = vtanh.pop %v968
        %v1786 = vtanh.pop %v973
        %v1787 = vtanh.pop %v976
        %v1788 = vtanh.pop %v981
        %v1789 = vtanh.pop %v984
        %v1790 = vtanh.pop %v989
        %v1791 = vtanh.pop %v992
        %v1792 = vtanh.pop %v997
        %v1793 = vtanh.pop %v1000
        %v1794 = vtanh.pop %v1005
        %v1795 = vtanh.pop %v1008
        %v1796 = vtanh.pop %v1013
        %v1797 = vtanh.pop %v1016
        %v1798 = vtanh.pop %v1021
        %v1799 = vtanh.pop %v1024
        %v1800 = vtanh.pop %v1029
        %v1801 = vtanh.pop %v1032
        %v1802 = vtanh.pop %v1037
        %v1803 = vtanh.pop %v1040
        %v1804 = vtanh.pop %v1045
        %v1805 = vtanh.pop %v1048
        %v1806 = vtanh.pop %v1053
        %v1807 = vtanh.pop %v1056
        %v1808 = vtanh.pop %v1061
        %v1809 = vtanh.pop %v1064
        %v1810 = vtanh.pop %v1069
        %v1811 = vtanh.pop %v1072
        %v1812 = vmul.f32 %v1717, %v1140
        %v1813 = vmul.f32 %v1719, %v1142
        %v1814 = vmul.f32 %v1721, %v1144
        %v1815 = vmul.f32 %v1723, %v1146
        %v1816 = vmul.f32 %v1725, %v1148
        %v1817 = vmul.f32 %v1727, %v1150
        %v1818 = vmul.f32 %v1729, %v1152
        %v1819 = vmul.f32 %v1731, %v1154
        %v1820 = vmul.f32 %v1733, %v1156
        %v1821 = vmul.f32 %v1735, %v1158
        %v1822 = vmul.f32 %v1737, %v1160
        %v1823 = vmul.f32 %v1739, %v1162
        %v1824 = vmul.f32 %v1741, %v1164
        %v1825 = vmul.f32 %v1743, %v1166
        %v1826 = vmul.f32 %v1745, %v1168
        %v1827 = vmul.f32 %v1747, %v1170
        %v1828 = vmul.f32 %v1749, %v1172
        %v1829 = vmul.f32 %v1751, %v1174
        %v1830 = vmul.f32 %v1753, %v1176
        %v1831 = vmul.f32 %v1755, %v1178
        %v1832 = vmul.f32 %v1757, %v1180
        %v1833 = vmul.f32 %v1759, %v1182
        %v1834 = vmul.f32 %v1761, %v1184
        %v1835 = vmul.f32 %v1763, %v1186
        %v1836 = vmul.f32 %v1765, %v1188
        %v1837 = vmul.f32 %v1767, %v1190
        %v1838 = vmul.f32 %v1769, %v1192
        %v1839 = vmul.f32 %v1771, %v1194
        %v1840 = vmul.f32 %v1773, %v1196
        %v1841 = vmul.f32 %v1775, %v1198
        %v1842 = vmul.f32 %v1777, %v1200
        %v1843 = vmul.f32 %v1779, %v1202
        %1876 = vrot.lane.b32.xlu0 %v1780, 32
        %v1877 = vpop.permute.xlu0 %1876
        %1878 = vrot.lane.b32.xlu0 %v1781, 32
        %v1879 = vpop.permute.xlu0 %1878
        %1880 = vrot.lane.b32.xlu0 %v1782, 32
        %v1881 = vpop.permute.xlu0 %1880
        %1882 = vrot.lane.b32.xlu0 %v1783, 32
        %v1883 = vpop.permute.xlu0 %1882
        %1884 = vrot.lane.b32.xlu0 %v1784, 32
        %v1885 = vpop.permute.xlu0 %1884
        %1886 = vrot.lane.b32.xlu0 %v1785, 32
        %v1887 = vpop.permute.xlu0 %1886
        %1888 = vrot.lane.b32.xlu0 %v1786, 32
        %v1889 = vpop.permute.xlu0 %1888
        %1890 = vrot.lane.b32.xlu0 %v1787, 32
        %v1891 = vpop.permute.xlu0 %1890
        %1892 = vrot.lane.b32.xlu0 %v1788, 32
        %v1893 = vpop.permute.xlu0 %1892
        %1894 = vrot.lane.b32.xlu0 %v1789, 32
        %v1895 = vpop.permute.xlu0 %1894
        %1896 = vrot.lane.b32.xlu0 %v1790, 32
        %v1897 = vpop.permute.xlu0 %1896
        %1898 = vrot.lane.b32.xlu0 %v1791, 32
        %v1899 = vpop.permute.xlu0 %1898
        %1900 = vrot.lane.b32.xlu0 %v1792, 32
        %v1901 = vpop.permute.xlu0 %1900
        %1902 = vrot.lane.b32.xlu0 %v1793, 32
        %v1903 = vpop.permute.xlu0 %1902
        %1904 = vrot.lane.b32.xlu0 %v1794, 32
        %v1905 = vpop.permute.xlu0 %1904
        %1906 = vrot.lane.b32.xlu0 %v1795, 32
        %v1907 = vpop.permute.xlu0 %1906
        %1908 = vrot.lane.b32.xlu0 %v1796, 32
        %v1909 = vpop.permute.xlu0 %1908
        %1910 = vrot.lane.b32.xlu0 %v1797, 32
        %v1911 = vpop.permute.xlu0 %1910
        %1912 = vrot.lane.b32.xlu0 %v1798, 32
        %v1913 = vpop.permute.xlu0 %1912
        %1914 = vrot.lane.b32.xlu0 %v1799, 32
        %v1915 = vpop.permute.xlu0 %1914
        %1916 = vrot.lane.b32.xlu0 %v1800, 32
        %v1917 = vpop.permute.xlu0 %1916
        %1918 = vrot.lane.b32.xlu0 %v1801, 32
        %v1919 = vpop.permute.xlu0 %1918
        %1920 = vrot.lane.b32.xlu0 %v1802, 32
        %v1921 = vpop.permute.xlu0 %1920
        %1922 = vrot.lane.b32.xlu0 %v1803, 32
        %v1923 = vpop.permute.xlu0 %1922
        %1924 = vrot.lane.b32.xlu0 %v1804, 32
        %v1925 = vpop.permute.xlu0 %1924
        %1926 = vrot.lane.b32.xlu0 %v1805, 32
        %v1927 = vpop.permute.xlu0 %1926
        %1928 = vrot.lane.b32.xlu0 %v1806, 32
        %v1929 = vpop.permute.xlu0 %1928
        %1930 = vrot.lane.b32.xlu0 %v1807, 32
        %v1931 = vpop.permute.xlu0 %1930
        %1932 = vrot.lane.b32.xlu0 %v1808, 32
        %v1933 = vpop.permute.xlu0 %1932
        %1934 = vrot.lane.b32.xlu0 %v1809, 32
        %v1935 = vpop.permute.xlu0 %1934
        %1936 = vrot.lane.b32.xlu0 %v1810, 32
        %v1937 = vpop.permute.xlu0 %1936
        %1938 = vrot.lane.b32.xlu0 %v1811, 32
        %v1939 = vpop.permute.xlu0 %1938
        %v1972 = vmul.f32 %v1717, %v1877
        %v1973 = vmul.f32 %v1719, %v1879
        %v1974 = vmul.f32 %v1721, %v1881
        %v1975 = vmul.f32 %v1723, %v1883
        %v1976 = vmul.f32 %v1725, %v1885
        %v1977 = vmul.f32 %v1727, %v1887
        %v1978 = vmul.f32 %v1729, %v1889
        %v1979 = vmul.f32 %v1731, %v1891
        %v1980 = vmul.f32 %v1733, %v1893
        %v1981 = vmul.f32 %v1735, %v1895
        %v1982 = vmul.f32 %v1737, %v1897
        %v1983 = vmul.f32 %v1739, %v1899
        %v1984 = vmul.f32 %v1741, %v1901
        %v1985 = vmul.f32 %v1743, %v1903
        %v1986 = vmul.f32 %v1745, %v1905
        %v1987 = vmul.f32 %v1747, %v1907
        %v1988 = vmul.f32 %v1749, %v1909
        %v1989 = vmul.f32 %v1751, %v1911
        %v1990 = vmul.f32 %v1753, %v1913
        %v1991 = vmul.f32 %v1755, %v1915
        %v1992 = vmul.f32 %v1757, %v1917
        %v1993 = vmul.f32 %v1759, %v1919
        %v1994 = vmul.f32 %v1761, %v1921
        %v1995 = vmul.f32 %v1763, %v1923
        %v1996 = vmul.f32 %v1765, %v1925
        %v1997 = vmul.f32 %v1767, %v1927
        %v1998 = vmul.f32 %v1769, %v1929
        %v1999 = vmul.f32 %v1771, %v1931
        %v2000 = vmul.f32 %v1773, %v1933
        %v2001 = vmul.f32 %v1775, %v1935
        %v2002 = vmul.f32 %v1777, %v1937
        %v2003 = vmul.f32 %v1779, %v1939
        %2036 = vrot.lane.b32.xlu0 %v1972, 32
        %v2037 = vpop.permute.xlu0 %2036
        %2038 = vrot.lane.b32.xlu0 %v1973, 32
        %v2039 = vpop.permute.xlu0 %2038
        %2040 = vrot.lane.b32.xlu0 %v1974, 32
        %v2041 = vpop.permute.xlu0 %2040
        %2042 = vrot.lane.b32.xlu0 %v1975, 32
        %v2043 = vpop.permute.xlu0 %2042
        %2044 = vrot.lane.b32.xlu0 %v1976, 32
        %v2045 = vpop.permute.xlu0 %2044
        %2046 = vrot.lane.b32.xlu0 %v1977, 32
        %v2047 = vpop.permute.xlu0 %2046
        %2048 = vrot.lane.b32.xlu0 %v1978, 32
        %v2049 = vpop.permute.xlu0 %2048
        %2050 = vrot.lane.b32.xlu0 %v1979, 32
        %v2051 = vpop.permute.xlu0 %2050
        %2052 = vrot.lane.b32.xlu0 %v1980, 32
        %v2053 = vpop.permute.xlu0 %2052
        %2054 = vrot.lane.b32.xlu0 %v1981, 32
        %v2055 = vpop.permute.xlu0 %2054
        %2056 = vrot.lane.b32.xlu0 %v1982, 32
        %v2057 = vpop.permute.xlu0 %2056
        %2058 = vrot.lane.b32.xlu0 %v1983, 32
        %v2059 = vpop.permute.xlu0 %2058
        %2060 = vrot.lane.b32.xlu0 %v1984, 32
        %v2061 = vpop.permute.xlu0 %2060
        %2062 = vrot.lane.b32.xlu0 %v1985, 32
        %v2063 = vpop.permute.xlu0 %2062
        %2064 = vrot.lane.b32.xlu0 %v1986, 32
        %v2065 = vpop.permute.xlu0 %2064
        %2066 = vrot.lane.b32.xlu0 %v1987, 32
        %v2067 = vpop.permute.xlu0 %2066
        %2068 = vrot.lane.b32.xlu0 %v1988, 32
        %v2069 = vpop.permute.xlu0 %2068
        %2070 = vrot.lane.b32.xlu0 %v1989, 32
        %v2071 = vpop.permute.xlu0 %2070
        %2072 = vrot.lane.b32.xlu0 %v1990, 32
        %v2073 = vpop.permute.xlu0 %2072
        %2074 = vrot.lane.b32.xlu0 %v1991, 32
        %v2075 = vpop.permute.xlu0 %2074
        %2076 = vrot.lane.b32.xlu0 %v1992, 32
        %v2077 = vpop.permute.xlu0 %2076
        %2078 = vrot.lane.b32.xlu0 %v1993, 32
        %v2079 = vpop.permute.xlu0 %2078
        %2080 = vrot.lane.b32.xlu0 %v1994, 32
        %v2081 = vpop.permute.xlu0 %2080
        %2082 = vrot.lane.b32.xlu0 %v1995, 32
        %v2083 = vpop.permute.xlu0 %2082
        %2084 = vrot.lane.b32.xlu0 %v1996, 32
        %v2085 = vpop.permute.xlu0 %2084
        %2086 = vrot.lane.b32.xlu0 %v1997, 32
        %v2087 = vpop.permute.xlu0 %2086
        %2088 = vrot.lane.b32.xlu0 %v1998, 32
        %v2089 = vpop.permute.xlu0 %2088
        %2090 = vrot.lane.b32.xlu0 %v1999, 32
        %v2091 = vpop.permute.xlu0 %2090
        %2092 = vrot.lane.b32.xlu0 %v2000, 32
        %v2093 = vpop.permute.xlu0 %2092
        %2094 = vrot.lane.b32.xlu0 %v2001, 32
        %v2095 = vpop.permute.xlu0 %2094
        %2096 = vrot.lane.b32.xlu0 %v2002, 32
        %v2097 = vpop.permute.xlu0 %2096
        %2098 = vrot.lane.b32.xlu0 %v2003, 32
        %v2099 = vpop.permute.xlu0 %2098
        %v2132 = vadd.f32 %v1812, %v2037
        %v2133 = vadd.f32 %v1813, %v2039
        %v2134 = vadd.f32 %v1814, %v2041
        %v2135 = vadd.f32 %v1815, %v2043
        %v2136 = vadd.f32 %v1816, %v2045
        %v2137 = vadd.f32 %v1817, %v2047
        %v2138 = vadd.f32 %v1818, %v2049
        %v2139 = vadd.f32 %v1819, %v2051
        %v2140 = vadd.f32 %v1820, %v2053
        %v2141 = vadd.f32 %v1821, %v2055
        %v2142 = vadd.f32 %v1822, %v2057
        %v2143 = vadd.f32 %v1823, %v2059
        %v2144 = vadd.f32 %v1824, %v2061
        %v2145 = vadd.f32 %v1825, %v2063
        %v2146 = vadd.f32 %v1826, %v2065
        %v2147 = vadd.f32 %v1827, %v2067
        %v2148 = vadd.f32 %v1828, %v2069
        %v2149 = vadd.f32 %v1829, %v2071
        %v2150 = vadd.f32 %v1830, %v2073
        %v2151 = vadd.f32 %v1831, %v2075
        %v2152 = vadd.f32 %v1832, %v2077
        %v2153 = vadd.f32 %v1833, %v2079
        %v2154 = vadd.f32 %v1834, %v2081
        %v2155 = vadd.f32 %v1835, %v2083
        %v2156 = vadd.f32 %v1836, %v2085
        %v2157 = vadd.f32 %v1837, %v2087
        %v2158 = vadd.f32 %v1838, %v2089
        %v2159 = vadd.f32 %v1839, %v2091
        %v2160 = vadd.f32 %v1840, %v2093
        %v2161 = vadd.f32 %v1841, %v2095
        %v2162 = vadd.f32 %v1842, %v2097
        %v2163 = vadd.f32 %v1843, %v2099
        %2196 = vrot.lane.b32.xlu0 %v2132, 64
        %v2197 = vpop.permute.xlu0 %2196
        %2198 = vrot.lane.b32.xlu0 %v2133, 64
        %v2199 = vpop.permute.xlu0 %2198
        %2200 = vrot.lane.b32.xlu0 %v2134, 64
        %v2201 = vpop.permute.xlu0 %2200
        %2202 = vrot.lane.b32.xlu0 %v2135, 64
        %v2203 = vpop.permute.xlu0 %2202
        %2204 = vrot.lane.b32.xlu0 %v2136, 64
        %v2205 = vpop.permute.xlu0 %2204
        %2206 = vrot.lane.b32.xlu0 %v2137, 64
        %v2207 = vpop.permute.xlu0 %2206
        %2208 = vrot.lane.b32.xlu0 %v2138, 64
        %v2209 = vpop.permute.xlu0 %2208
        %2210 = vrot.lane.b32.xlu0 %v2139, 64
        %v2211 = vpop.permute.xlu0 %2210
        %2212 = vrot.lane.b32.xlu0 %v2140, 64
        %v2213 = vpop.permute.xlu0 %2212
        %2214 = vrot.lane.b32.xlu0 %v2141, 64
        %v2215 = vpop.permute.xlu0 %2214
        %2216 = vrot.lane.b32.xlu0 %v2142, 64
        %v2217 = vpop.permute.xlu0 %2216
        %2218 = vrot.lane.b32.xlu0 %v2143, 64
        %v2219 = vpop.permute.xlu0 %2218
        %2220 = vrot.lane.b32.xlu0 %v2144, 64
        %v2221 = vpop.permute.xlu0 %2220
        %2222 = vrot.lane.b32.xlu0 %v2145, 64
        %v2223 = vpop.permute.xlu0 %2222
        %2224 = vrot.lane.b32.xlu0 %v2146, 64
        %v2225 = vpop.permute.xlu0 %2224
        %2226 = vrot.lane.b32.xlu0 %v2147, 64
        %v2227 = vpop.permute.xlu0 %2226
        %2228 = vrot.lane.b32.xlu0 %v2148, 64
        %v2229 = vpop.permute.xlu0 %2228
        %2230 = vrot.lane.b32.xlu0 %v2149, 64
        %v2231 = vpop.permute.xlu0 %2230
        %2232 = vrot.lane.b32.xlu0 %v2150, 64
        %v2233 = vpop.permute.xlu0 %2232
        %2234 = vrot.lane.b32.xlu0 %v2151, 64
        %v2235 = vpop.permute.xlu0 %2234
        %2236 = vrot.lane.b32.xlu0 %v2152, 64
        %v2237 = vpop.permute.xlu0 %2236
        %2238 = vrot.lane.b32.xlu0 %v2153, 64
        %v2239 = vpop.permute.xlu0 %2238
        %2240 = vrot.lane.b32.xlu0 %v2154, 64
        %v2241 = vpop.permute.xlu0 %2240
        %2242 = vrot.lane.b32.xlu0 %v2155, 64
        %v2243 = vpop.permute.xlu0 %2242
        %2244 = vrot.lane.b32.xlu0 %v2156, 64
        %v2245 = vpop.permute.xlu0 %2244
        %2246 = vrot.lane.b32.xlu0 %v2157, 64
        %v2247 = vpop.permute.xlu0 %2246
        %2248 = vrot.lane.b32.xlu0 %v2158, 64
        %v2249 = vpop.permute.xlu0 %2248
        %2250 = vrot.lane.b32.xlu0 %v2159, 64
        %v2251 = vpop.permute.xlu0 %2250
        %2252 = vrot.lane.b32.xlu0 %v2160, 64
        %v2253 = vpop.permute.xlu0 %2252
        %2254 = vrot.lane.b32.xlu0 %v2161, 64
        %v2255 = vpop.permute.xlu0 %2254
        %2256 = vrot.lane.b32.xlu0 %v2162, 64
        %v2257 = vpop.permute.xlu0 %2256
        %2258 = vrot.lane.b32.xlu0 %v2163, 64
        %v2259 = vpop.permute.xlu0 %2258
        %v2292 = vmul.f32 %v1075, %v2197
        %v2293 = vmul.f32 %v1076, %v2199
        %v2294 = vmul.f32 %v1077, %v2201
        %v2295 = vmul.f32 %v1078, %v2203
        %v2296 = vmul.f32 %v1079, %v2205
        %v2297 = vmul.f32 %v1080, %v2207
        %v2298 = vmul.f32 %v1081, %v2209
        %v2299 = vmul.f32 %v1082, %v2211
        %v2300 = vmul.f32 %v1083, %v2213
        %v2301 = vmul.f32 %v1084, %v2215
        %v2302 = vmul.f32 %v1085, %v2217
        %v2303 = vmul.f32 %v1086, %v2219
        %v2304 = vmul.f32 %v1087, %v2221
        %v2305 = vmul.f32 %v1088, %v2223
        %v2306 = vmul.f32 %v1089, %v2225
        %v2307 = vmul.f32 %v1090, %v2227
        %v2308 = vmul.f32 %v1091, %v2229
        %v2309 = vmul.f32 %v1092, %v2231
        %v2310 = vmul.f32 %v1093, %v2233
        %v2311 = vmul.f32 %v1094, %v2235
        %v2312 = vmul.f32 %v1095, %v2237
        %v2313 = vmul.f32 %v1096, %v2239
        %v2314 = vmul.f32 %v1097, %v2241
        %v2315 = vmul.f32 %v1098, %v2243
        %v2316 = vmul.f32 %v1099, %v2245
        %v2317 = vmul.f32 %v1100, %v2247
        %v2318 = vmul.f32 %v1101, %v2249
        %v2319 = vmul.f32 %v1102, %v2251
        %v2320 = vmul.f32 %v1103, %v2253
        %v2321 = vmul.f32 %v1104, %v2255
        %v2322 = vmul.f32 %v1105, %v2257
        %v2323 = vmul.f32 %v1106, %v2259
        %2356 = vrot.lane.b32.xlu0 %v2292, 96
        %v2357 = vpop.permute.xlu0 %2356
        %2358 = vrot.lane.b32.xlu0 %v2293, 96
        %v2359 = vpop.permute.xlu0 %2358
        %2360 = vrot.lane.b32.xlu0 %v2294, 96
        %v2361 = vpop.permute.xlu0 %2360
        %2362 = vrot.lane.b32.xlu0 %v2295, 96
        %v2363 = vpop.permute.xlu0 %2362
        %2364 = vrot.lane.b32.xlu0 %v2296, 96
        %v2365 = vpop.permute.xlu0 %2364
        %2366 = vrot.lane.b32.xlu0 %v2297, 96
        %v2367 = vpop.permute.xlu0 %2366
        %2368 = vrot.lane.b32.xlu0 %v2298, 96
        %v2369 = vpop.permute.xlu0 %2368
        %2370 = vrot.lane.b32.xlu0 %v2299, 96
        %v2371 = vpop.permute.xlu0 %2370
        %2372 = vrot.lane.b32.xlu0 %v2300, 96
        %v2373 = vpop.permute.xlu0 %2372
        %2374 = vrot.lane.b32.xlu0 %v2301, 96
        %v2375 = vpop.permute.xlu0 %2374
        %2376 = vrot.lane.b32.xlu0 %v2302, 96
        %v2377 = vpop.permute.xlu0 %2376
        %2378 = vrot.lane.b32.xlu0 %v2303, 96
        %v2379 = vpop.permute.xlu0 %2378
        %2380 = vrot.lane.b32.xlu0 %v2304, 96
        %v2381 = vpop.permute.xlu0 %2380
        %2382 = vrot.lane.b32.xlu0 %v2305, 96
        %v2383 = vpop.permute.xlu0 %2382
        %2384 = vrot.lane.b32.xlu0 %v2306, 96
        %v2385 = vpop.permute.xlu0 %2384
        %2386 = vrot.lane.b32.xlu0 %v2307, 96
        %v2387 = vpop.permute.xlu0 %2386
        %2388 = vrot.lane.b32.xlu0 %v2308, 96
        %v2389 = vpop.permute.xlu0 %2388
        %2390 = vrot.lane.b32.xlu0 %v2309, 96
        %v2391 = vpop.permute.xlu0 %2390
        %2392 = vrot.lane.b32.xlu0 %v2310, 96
        %v2393 = vpop.permute.xlu0 %2392
        %2394 = vrot.lane.b32.xlu0 %v2311, 96
        %v2395 = vpop.permute.xlu0 %2394
        %2396 = vrot.lane.b32.xlu0 %v2312, 96
        %v2397 = vpop.permute.xlu0 %2396
        %2398 = vrot.lane.b32.xlu0 %v2313, 96
        %v2399 = vpop.permute.xlu0 %2398
        %2400 = vrot.lane.b32.xlu0 %v2314, 96
        %v2401 = vpop.permute.xlu0 %2400
        %2402 = vrot.lane.b32.xlu0 %v2315, 96
        %v2403 = vpop.permute.xlu0 %2402
        %2404 = vrot.lane.b32.xlu0 %v2316, 96
        %v2405 = vpop.permute.xlu0 %2404
        %2406 = vrot.lane.b32.xlu0 %v2317, 96
        %v2407 = vpop.permute.xlu0 %2406
        %2408 = vrot.lane.b32.xlu0 %v2318, 96
        %v2409 = vpop.permute.xlu0 %2408
        %2410 = vrot.lane.b32.xlu0 %v2319, 96
        %v2411 = vpop.permute.xlu0 %2410
        %2412 = vrot.lane.b32.xlu0 %v2320, 96
        %v2413 = vpop.permute.xlu0 %2412
        %2414 = vrot.lane.b32.xlu0 %v2321, 96
        %v2415 = vpop.permute.xlu0 %2414
        %2416 = vrot.lane.b32.xlu0 %v2322, 96
        %v2417 = vpop.permute.xlu0 %2416
        %2418 = vrot.lane.b32.xlu0 %v2323, 96
        %v2419 = vpop.permute.xlu0 %2418
        %v2452 = vadd.f32 %v949, %v2357
        %v2453 = vadd.f32 %v952, %v2359
        %v2454 = vadd.f32 %v957, %v2361
        %v2455 = vadd.f32 %v960, %v2363
        %v2456 = vadd.f32 %v965, %v2365
        %v2457 = vadd.f32 %v968, %v2367
        %v2458 = vadd.f32 %v973, %v2369
        %v2459 = vadd.f32 %v976, %v2371
        %v2460 = vadd.f32 %v981, %v2373
        %v2461 = vadd.f32 %v984, %v2375
        %v2462 = vadd.f32 %v989, %v2377
        %v2463 = vadd.f32 %v992, %v2379
        %v2464 = vadd.f32 %v997, %v2381
        %v2465 = vadd.f32 %v1000, %v2383
        %v2466 = vadd.f32 %v1005, %v2385
        %v2467 = vadd.f32 %v1008, %v2387
        %v2468 = vadd.f32 %v1013, %v2389
        %v2469 = vadd.f32 %v1016, %v2391
        %v2470 = vadd.f32 %v1021, %v2393
        %v2471 = vadd.f32 %v1024, %v2395
        %v2472 = vadd.f32 %v1029, %v2397
        %v2473 = vadd.f32 %v1032, %v2399
        %v2474 = vadd.f32 %v1037, %v2401
        %v2475 = vadd.f32 %v1040, %v2403
        %v2476 = vadd.f32 %v1045, %v2405
        %v2477 = vadd.f32 %v1048, %v2407
        %v2478 = vadd.f32 %v1053, %v2409
        %v2479 = vadd.f32 %v1056, %v2411
        %v2480 = vadd.f32 %v1061, %v2413
        %v2481 = vadd.f32 %v1064, %v2415
        %v2482 = vadd.f32 %v1069, %v2417
        %v2483 = vadd.f32 %v1072, %v2419
        %v2484 = vxor.u32 %v2452, 2147483648
        %v2485 = vxor.u32 %v2453, 2147483648
        %v2486 = vxor.u32 %v2454, 2147483648
        %v2487 = vxor.u32 %v2455, 2147483648
        %v2488 = vxor.u32 %v2456, 2147483648
        %v2489 = vxor.u32 %v2457, 2147483648
        %v2490 = vxor.u32 %v2458, 2147483648
        %v2491 = vxor.u32 %v2459, 2147483648
        %v2492 = vxor.u32 %v2460, 2147483648
        %v2493 = vxor.u32 %v2461, 2147483648
        %v2494 = vxor.u32 %v2462, 2147483648
        %v2495 = vxor.u32 %v2463, 2147483648
        %v2496 = vxor.u32 %v2464, 2147483648
        %v2497 = vxor.u32 %v2465, 2147483648
        %v2498 = vxor.u32 %v2466, 2147483648
        %v2499 = vxor.u32 %v2467, 2147483648
        %v2500 = vxor.u32 %v2468, 2147483648
        %v2501 = vxor.u32 %v2469, 2147483648
        %v2502 = vxor.u32 %v2470, 2147483648
        %v2503 = vxor.u32 %v2471, 2147483648
        %v2504 = vxor.u32 %v2472, 2147483648
        %v2505 = vxor.u32 %v2473, 2147483648
        %v2506 = vxor.u32 %v2474, 2147483648
        %v2507 = vxor.u32 %v2475, 2147483648
        %v2508 = vxor.u32 %v2476, 2147483648
        %v2509 = vxor.u32 %v2477, 2147483648
        %v2510 = vxor.u32 %v2478, 2147483648
        %v2511 = vxor.u32 %v2479, 2147483648
        %v2512 = vxor.u32 %v2480, 2147483648
        %v2513 = vxor.u32 %v2481, 2147483648
        %v2514 = vxor.u32 %v2482, 2147483648
        %v2515 = vxor.u32 %v2483, 2147483648
        %v2516 = vmul.f32 %v2484, 1.442695
        %v2517 = vpow.pop %v2516
        %v2518 = vmul.f32 %v2485, 1.442695
        %v2519 = vpow.pop %v2518
        %v2520 = vmul.f32 %v2486, 1.442695
        %v2521 = vpow.pop %v2520
        %v2522 = vmul.f32 %v2487, 1.442695
        %v2523 = vpow.pop %v2522
        %v2524 = vmul.f32 %v2488, 1.442695
        %v2525 = vpow.pop %v2524
        %v2526 = vmul.f32 %v2489, 1.442695
        %v2527 = vpow.pop %v2526
        %v2528 = vmul.f32 %v2490, 1.442695
        %v2529 = vpow.pop %v2528
        %v2530 = vmul.f32 %v2491, 1.442695
        %v2531 = vpow.pop %v2530
        %v2532 = vmul.f32 %v2492, 1.442695
        %v2533 = vpow.pop %v2532
        %v2534 = vmul.f32 %v2493, 1.442695
        %v2535 = vpow.pop %v2534
        %v2536 = vmul.f32 %v2494, 1.442695
        %v2537 = vpow.pop %v2536
        %v2538 = vmul.f32 %v2495, 1.442695
        %v2539 = vpow.pop %v2538
        %v2540 = vmul.f32 %v2496, 1.442695
        %v2541 = vpow.pop %v2540
        %v2542 = vmul.f32 %v2497, 1.442695
        %v2543 = vpow.pop %v2542
        %v2544 = vmul.f32 %v2498, 1.442695
        %v2545 = vpow.pop %v2544
        %v2546 = vmul.f32 %v2499, 1.442695
        %v2547 = vpow.pop %v2546
        %v2548 = vmul.f32 %v2500, 1.442695
        %v2549 = vpow.pop %v2548
        %v2550 = vmul.f32 %v2501, 1.442695
        %v2551 = vpow.pop %v2550
        %v2552 = vmul.f32 %v2502, 1.442695
        %v2553 = vpow.pop %v2552
        %v2554 = vmul.f32 %v2503, 1.442695
        %v2555 = vpow.pop %v2554
        %v2556 = vmul.f32 %v2504, 1.442695
        %v2557 = vpow.pop %v2556
        %v2558 = vmul.f32 %v2505, 1.442695
        %v2559 = vpow.pop %v2558
        %v2560 = vmul.f32 %v2506, 1.442695
        %v2561 = vpow.pop %v2560
        %v2562 = vmul.f32 %v2507, 1.442695
        %v2563 = vpow.pop %v2562
        %v2564 = vmul.f32 %v2508, 1.442695
        %v2565 = vpow.pop %v2564
        %v2566 = vmul.f32 %v2509, 1.442695
        %v2567 = vpow.pop %v2566
        %v2568 = vmul.f32 %v2510, 1.442695
        %v2569 = vpow.pop %v2568
        %v2570 = vmul.f32 %v2511, 1.442695
        %v2571 = vpow.pop %v2570
        %v2572 = vmul.f32 %v2512, 1.442695
        %v2573 = vpow.pop %v2572
        %v2574 = vmul.f32 %v2513, 1.442695
        %v2575 = vpow.pop %v2574
        %v2576 = vmul.f32 %v2514, 1.442695
        %v2577 = vpow.pop %v2576
        %v2578 = vmul.f32 %v2515, 1.442695
        %v2579 = vpow.pop %v2578
        %v2580 = vadd.f32 %v2517, 1.0
        %v2581 = vadd.f32 %v2519, 1.0
        %v2582 = vadd.f32 %v2521, 1.0
        %v2583 = vadd.f32 %v2523, 1.0
        %v2584 = vadd.f32 %v2525, 1.0
        %v2585 = vadd.f32 %v2527, 1.0
        %v2586 = vadd.f32 %v2529, 1.0
        %v2587 = vadd.f32 %v2531, 1.0
        %v2588 = vadd.f32 %v2533, 1.0
        %v2589 = vadd.f32 %v2535, 1.0
        %v2590 = vadd.f32 %v2537, 1.0
        %v2591 = vadd.f32 %v2539, 1.0
        %v2592 = vadd.f32 %v2541, 1.0
        %v2593 = vadd.f32 %v2543, 1.0
        %v2594 = vadd.f32 %v2545, 1.0
        %v2595 = vadd.f32 %v2547, 1.0
        %v2596 = vadd.f32 %v2549, 1.0
        %v2597 = vadd.f32 %v2551, 1.0
        %v2598 = vadd.f32 %v2553, 1.0
        %v2599 = vadd.f32 %v2555, 1.0
        %v2600 = vadd.f32 %v2557, 1.0
        %v2601 = vadd.f32 %v2559, 1.0
        %v2602 = vadd.f32 %v2561, 1.0
        %v2603 = vadd.f32 %v2563, 1.0
        %v2604 = vadd.f32 %v2565, 1.0
        %v2605 = vadd.f32 %v2567, 1.0
        %v2606 = vadd.f32 %v2569, 1.0
        %v2607 = vadd.f32 %v2571, 1.0
        %v2608 = vadd.f32 %v2573, 1.0
        %v2609 = vadd.f32 %v2575, 1.0
        %v2610 = vadd.f32 %v2577, 1.0
        %v2611 = vadd.f32 %v2579, 1.0
        %v2612 = vrcp.pop %v2580
        %v2613 = vmul.f32 1.0, %v2612
        %v2614 = vrcp.pop %v2581
        %v2615 = vmul.f32 1.0, %v2614
        %v2616 = vrcp.pop %v2582
        %v2617 = vmul.f32 1.0, %v2616
        %v2618 = vrcp.pop %v2583
        %v2619 = vmul.f32 1.0, %v2618
        %v2620 = vrcp.pop %v2584
        %v2621 = vmul.f32 1.0, %v2620
        %v2622 = vrcp.pop %v2585
        %v2623 = vmul.f32 1.0, %v2622
        %v2624 = vrcp.pop %v2586
        %v2625 = vmul.f32 1.0, %v2624
        %v2626 = vrcp.pop %v2587
        %v2627 = vmul.f32 1.0, %v2626
        %v2628 = vrcp.pop %v2588
        %v2629 = vmul.f32 1.0, %v2628
        %v2630 = vrcp.pop %v2589
        %v2631 = vmul.f32 1.0, %v2630
        %v2632 = vrcp.pop %v2590
        %v2633 = vmul.f32 1.0, %v2632
        %v2634 = vrcp.pop %v2591
        %v2635 = vmul.f32 1.0, %v2634
        %v2636 = vrcp.pop %v2592
        %v2637 = vmul.f32 1.0, %v2636
        %v2638 = vrcp.pop %v2593
        %v2639 = vmul.f32 1.0, %v2638
        %v2640 = vrcp.pop %v2594
        %v2641 = vmul.f32 1.0, %v2640
        %v2642 = vrcp.pop %v2595
        %v2643 = vmul.f32 1.0, %v2642
        %v2644 = vrcp.pop %v2596
        %v2645 = vmul.f32 1.0, %v2644
        %v2646 = vrcp.pop %v2597
        %v2647 = vmul.f32 1.0, %v2646
        %v2648 = vrcp.pop %v2598
        %v2649 = vmul.f32 1.0, %v2648
        %v2650 = vrcp.pop %v2599
        %v2651 = vmul.f32 1.0, %v2650
        %v2652 = vrcp.pop %v2600
        %v2653 = vmul.f32 1.0, %v2652
        %v2654 = vrcp.pop %v2601
        %v2655 = vmul.f32 1.0, %v2654
        %v2656 = vrcp.pop %v2602
        %v2657 = vmul.f32 1.0, %v2656
        %v2658 = vrcp.pop %v2603
        %v2659 = vmul.f32 1.0, %v2658
        %v2660 = vrcp.pop %v2604
        %v2661 = vmul.f32 1.0, %v2660
        %v2662 = vrcp.pop %v2605
        %v2663 = vmul.f32 1.0, %v2662
        %v2664 = vrcp.pop %v2606
        %v2665 = vmul.f32 1.0, %v2664
        %v2666 = vrcp.pop %v2607
        %v2667 = vmul.f32 1.0, %v2666
        %v2668 = vrcp.pop %v2608
        %v2669 = vmul.f32 1.0, %v2668
        %v2670 = vrcp.pop %v2609
        %v2671 = vmul.f32 1.0, %v2670
        %v2672 = vrcp.pop %v2610
        %v2673 = vmul.f32 1.0, %v2672
        %v2674 = vrcp.pop %v2611
        %v2675 = vmul.f32 1.0, %v2674
        %v2676 = vtanh.pop %v2132
        %v2677 = vtanh.pop %v2133
        %v2678 = vtanh.pop %v2134
        %v2679 = vtanh.pop %v2135
        %v2680 = vtanh.pop %v2136
        %v2681 = vtanh.pop %v2137
        %v2682 = vtanh.pop %v2138
        %v2683 = vtanh.pop %v2139
        %v2684 = vtanh.pop %v2140
        %v2685 = vtanh.pop %v2141
        %v2686 = vtanh.pop %v2142
        %v2687 = vtanh.pop %v2143
        %v2688 = vtanh.pop %v2144
        %v2689 = vtanh.pop %v2145
        %v2690 = vtanh.pop %v2146
        %v2691 = vtanh.pop %v2147
        %v2692 = vtanh.pop %v2148
        %v2693 = vtanh.pop %v2149
        %v2694 = vtanh.pop %v2150
        %v2695 = vtanh.pop %v2151
        %v2696 = vtanh.pop %v2152
        %v2697 = vtanh.pop %v2153
        %v2698 = vtanh.pop %v2154
        %v2699 = vtanh.pop %v2155
        %v2700 = vtanh.pop %v2156
        %v2701 = vtanh.pop %v2157
        %v2702 = vtanh.pop %v2158
        %v2703 = vtanh.pop %v2159
        %v2704 = vtanh.pop %v2160
        %v2705 = vtanh.pop %v2161
        %v2706 = vtanh.pop %v2162
        %v2707 = vtanh.pop %v2163
        %2740 = vrot.lane.b32.xlu0 %v2676, 32
        %v2741 = vpop.permute.xlu0 %2740
        %2742 = vrot.lane.b32.xlu0 %v2677, 32
        %v2743 = vpop.permute.xlu0 %2742
        %2744 = vrot.lane.b32.xlu0 %v2678, 32
        %v2745 = vpop.permute.xlu0 %2744
        %2746 = vrot.lane.b32.xlu0 %v2679, 32
        %v2747 = vpop.permute.xlu0 %2746
        %2748 = vrot.lane.b32.xlu0 %v2680, 32
        %v2749 = vpop.permute.xlu0 %2748
        %2750 = vrot.lane.b32.xlu0 %v2681, 32
        %v2751 = vpop.permute.xlu0 %2750
        %2752 = vrot.lane.b32.xlu0 %v2682, 32
        %v2753 = vpop.permute.xlu0 %2752
        %2754 = vrot.lane.b32.xlu0 %v2683, 32
        %v2755 = vpop.permute.xlu0 %2754
        %2756 = vrot.lane.b32.xlu0 %v2684, 32
        %v2757 = vpop.permute.xlu0 %2756
        %2758 = vrot.lane.b32.xlu0 %v2685, 32
        %v2759 = vpop.permute.xlu0 %2758
        %2760 = vrot.lane.b32.xlu0 %v2686, 32
        %v2761 = vpop.permute.xlu0 %2760
        %2762 = vrot.lane.b32.xlu0 %v2687, 32
        %v2763 = vpop.permute.xlu0 %2762
        %2764 = vrot.lane.b32.xlu0 %v2688, 32
        %v2765 = vpop.permute.xlu0 %2764
        %2766 = vrot.lane.b32.xlu0 %v2689, 32
        %v2767 = vpop.permute.xlu0 %2766
        %2768 = vrot.lane.b32.xlu0 %v2690, 32
        %v2769 = vpop.permute.xlu0 %2768
        %2770 = vrot.lane.b32.xlu0 %v2691, 32
        %v2771 = vpop.permute.xlu0 %2770
        %2772 = vrot.lane.b32.xlu0 %v2692, 32
        %v2773 = vpop.permute.xlu0 %2772
        %2774 = vrot.lane.b32.xlu0 %v2693, 32
        %v2775 = vpop.permute.xlu0 %2774
        %2776 = vrot.lane.b32.xlu0 %v2694, 32
        %v2777 = vpop.permute.xlu0 %2776
        %2778 = vrot.lane.b32.xlu0 %v2695, 32
        %v2779 = vpop.permute.xlu0 %2778
        %2780 = vrot.lane.b32.xlu0 %v2696, 32
        %v2781 = vpop.permute.xlu0 %2780
        %2782 = vrot.lane.b32.xlu0 %v2697, 32
        %v2783 = vpop.permute.xlu0 %2782
        %2784 = vrot.lane.b32.xlu0 %v2698, 32
        %v2785 = vpop.permute.xlu0 %2784
        %2786 = vrot.lane.b32.xlu0 %v2699, 32
        %v2787 = vpop.permute.xlu0 %2786
        %2788 = vrot.lane.b32.xlu0 %v2700, 32
        %v2789 = vpop.permute.xlu0 %2788
        %2790 = vrot.lane.b32.xlu0 %v2701, 32
        %v2791 = vpop.permute.xlu0 %2790
        %2792 = vrot.lane.b32.xlu0 %v2702, 32
        %v2793 = vpop.permute.xlu0 %2792
        %2794 = vrot.lane.b32.xlu0 %v2703, 32
        %v2795 = vpop.permute.xlu0 %2794
        %2796 = vrot.lane.b32.xlu0 %v2704, 32
        %v2797 = vpop.permute.xlu0 %2796
        %2798 = vrot.lane.b32.xlu0 %v2705, 32
        %v2799 = vpop.permute.xlu0 %2798
        %2800 = vrot.lane.b32.xlu0 %v2706, 32
        %v2801 = vpop.permute.xlu0 %2800
        %2802 = vrot.lane.b32.xlu0 %v2707, 32
        %v2803 = vpop.permute.xlu0 %2802
        %v2836 = vmul.f32 %v2613, %v2741
        %v2837 = vmul.f32 %v2615, %v2743
        %v2838 = vmul.f32 %v2617, %v2745
        %v2839 = vmul.f32 %v2619, %v2747
        %v2840 = vmul.f32 %v2621, %v2749
        %v2841 = vmul.f32 %v2623, %v2751
        %v2842 = vmul.f32 %v2625, %v2753
        %v2843 = vmul.f32 %v2627, %v2755
        %v2844 = vmul.f32 %v2629, %v2757
        %v2845 = vmul.f32 %v2631, %v2759
        %v2846 = vmul.f32 %v2633, %v2761
        %v2847 = vmul.f32 %v2635, %v2763
        %v2848 = vmul.f32 %v2637, %v2765
        %v2849 = vmul.f32 %v2639, %v2767
        %v2850 = vmul.f32 %v2641, %v2769
        %v2851 = vmul.f32 %v2643, %v2771
        %v2852 = vmul.f32 %v2645, %v2773
        %v2853 = vmul.f32 %v2647, %v2775
        %v2854 = vmul.f32 %v2649, %v2777
        %v2855 = vmul.f32 %v2651, %v2779
        %v2856 = vmul.f32 %v2653, %v2781
        %v2857 = vmul.f32 %v2655, %v2783
        %v2858 = vmul.f32 %v2657, %v2785
        %v2859 = vmul.f32 %v2659, %v2787
        %v2860 = vmul.f32 %v2661, %v2789
        %v2861 = vmul.f32 %v2663, %v2791
        %v2862 = vmul.f32 %v2665, %v2793
        %v2863 = vmul.f32 %v2667, %v2795
        %v2864 = vmul.f32 %v2669, %v2797
        %v2865 = vmul.f32 %v2671, %v2799
        %v2866 = vmul.f32 %v2673, %v2801
        %v2867 = vmul.f32 %v2675, %v2803
        %2900 = vrot.lane.b32.xlu0 %v2836, 64
        %v2901 = vpop.permute.xlu0 %2900
        %2902 = vrot.lane.b32.xlu0 %v2837, 64
        %v2903 = vpop.permute.xlu0 %2902
        %2904 = vrot.lane.b32.xlu0 %v2838, 64
        %v2905 = vpop.permute.xlu0 %2904
        %2906 = vrot.lane.b32.xlu0 %v2839, 64
        %v2907 = vpop.permute.xlu0 %2906
        %2908 = vrot.lane.b32.xlu0 %v2840, 64
        %v2909 = vpop.permute.xlu0 %2908
        %2910 = vrot.lane.b32.xlu0 %v2841, 64
        %v2911 = vpop.permute.xlu0 %2910
        %2912 = vrot.lane.b32.xlu0 %v2842, 64
        %v2913 = vpop.permute.xlu0 %2912
        %2914 = vrot.lane.b32.xlu0 %v2843, 64
        %v2915 = vpop.permute.xlu0 %2914
        %2916 = vrot.lane.b32.xlu0 %v2844, 64
        %v2917 = vpop.permute.xlu0 %2916
        %2918 = vrot.lane.b32.xlu0 %v2845, 64
        %v2919 = vpop.permute.xlu0 %2918
        %2920 = vrot.lane.b32.xlu0 %v2846, 64
        %v2921 = vpop.permute.xlu0 %2920
        %2922 = vrot.lane.b32.xlu0 %v2847, 64
        %v2923 = vpop.permute.xlu0 %2922
        %2924 = vrot.lane.b32.xlu0 %v2848, 64
        %v2925 = vpop.permute.xlu0 %2924
        %2926 = vrot.lane.b32.xlu0 %v2849, 64
        %v2927 = vpop.permute.xlu0 %2926
        %2928 = vrot.lane.b32.xlu0 %v2850, 64
        %v2929 = vpop.permute.xlu0 %2928
        %2930 = vrot.lane.b32.xlu0 %v2851, 64
        %v2931 = vpop.permute.xlu0 %2930
        %2932 = vrot.lane.b32.xlu0 %v2852, 64
        %v2933 = vpop.permute.xlu0 %2932
        %2934 = vrot.lane.b32.xlu0 %v2853, 64
        %v2935 = vpop.permute.xlu0 %2934
        %2936 = vrot.lane.b32.xlu0 %v2854, 64
        %v2937 = vpop.permute.xlu0 %2936
        %2938 = vrot.lane.b32.xlu0 %v2855, 64
        %v2939 = vpop.permute.xlu0 %2938
        %2940 = vrot.lane.b32.xlu0 %v2856, 64
        %v2941 = vpop.permute.xlu0 %2940
        %2942 = vrot.lane.b32.xlu0 %v2857, 64
        %v2943 = vpop.permute.xlu0 %2942
        %2944 = vrot.lane.b32.xlu0 %v2858, 64
        %v2945 = vpop.permute.xlu0 %2944
        %2946 = vrot.lane.b32.xlu0 %v2859, 64
        %v2947 = vpop.permute.xlu0 %2946
        %2948 = vrot.lane.b32.xlu0 %v2860, 64
        %v2949 = vpop.permute.xlu0 %2948
        %2950 = vrot.lane.b32.xlu0 %v2861, 64
        %v2951 = vpop.permute.xlu0 %2950
        %2952 = vrot.lane.b32.xlu0 %v2862, 64
        %v2953 = vpop.permute.xlu0 %2952
        %2954 = vrot.lane.b32.xlu0 %v2863, 64
        %v2955 = vpop.permute.xlu0 %2954
        %2956 = vrot.lane.b32.xlu0 %v2864, 64
        %v2957 = vpop.permute.xlu0 %2956
        %2958 = vrot.lane.b32.xlu0 %v2865, 64
        %v2959 = vpop.permute.xlu0 %2958
        %2960 = vrot.lane.b32.xlu0 %v2866, 64
        %v2961 = vpop.permute.xlu0 %2960
        %2962 = vrot.lane.b32.xlu0 %v2867, 64
        %v2963 = vpop.permute.xlu0 %2962
        %v2996 = vsel %vm1235, %v2901, %v2132
        %v2997 = vsel %vm1235, %v2903, %v2133
        %v2998 = vsel %vm1235, %v2905, %v2134
        %v2999 = vsel %vm1235, %v2907, %v2135
        %v3000 = vsel %vm1235, %v2909, %v2136
        %v3001 = vsel %vm1235, %v2911, %v2137
        %v3002 = vsel %vm1235, %v2913, %v2138
        %v3003 = vsel %vm1235, %v2915, %v2139
        %v3004 = vsel %vm1235, %v2917, %v2140
        %v3005 = vsel %vm1235, %v2919, %v2141
        %v3006 = vsel %vm1235, %v2921, %v2142
        %v3007 = vsel %vm1235, %v2923, %v2143
        %v3008 = vsel %vm1235, %v2925, %v2144
        %v3009 = vsel %vm1235, %v2927, %v2145
        %v3010 = vsel %vm1235, %v2929, %v2146
        %v3011 = vsel %vm1235, %v2931, %v2147
        %v3012 = vsel %vm1235, %v2933, %v2148
        %v3013 = vsel %vm1235, %v2935, %v2149
        %v3014 = vsel %vm1235, %v2937, %v2150
        %v3015 = vsel %vm1235, %v2939, %v2151
        %v3016 = vsel %vm1235, %v2941, %v2152
        %v3017 = vsel %vm1235, %v2943, %v2153
        %v3018 = vsel %vm1235, %v2945, %v2154
        %v3019 = vsel %vm1235, %v2947, %v2155
        %v3020 = vsel %vm1235, %v2949, %v2156
        %v3021 = vsel %vm1235, %v2951, %v2157
        %v3022 = vsel %vm1235, %v2953, %v2158
        %v3023 = vsel %vm1235, %v2955, %v2159
        %v3024 = vsel %vm1235, %v2957, %v2160
        %v3025 = vsel %vm1235, %v2959, %v2161
        %v3026 = vsel %vm1235, %v2961, %v2162
        %v3027 = vsel %vm1235, %v2963, %v2163
        %vm3028 = vcmask 523264
        %v3029 = vsel %vm3028, %v2996, 0.0
        %v3030 = vsel %vm3028, %v2997, 0.0
        %v3031 = vsel %vm3028, %v2998, 0.0
        %v3032 = vsel %vm3028, %v2999, 0.0
        %v3033 = vsel %vm3028, %v3000, 0.0
        %v3034 = vsel %vm3028, %v3001, 0.0
        %v3035 = vsel %vm3028, %v3002, 0.0
        %v3036 = vsel %vm3028, %v3003, 0.0
        %v3037 = vsel %vm3028, %v3004, 0.0
        %v3038 = vsel %vm3028, %v3005, 0.0
        %v3039 = vsel %vm3028, %v3006, 0.0
        %v3040 = vsel %vm3028, %v3007, 0.0
        %v3041 = vsel %vm3028, %v3008, 0.0
        %v3042 = vsel %vm3028, %v3009, 0.0
        %v3043 = vsel %vm3028, %v3010, 0.0
        %v3044 = vsel %vm3028, %v3011, 0.0
        %v3045 = vsel %vm3028, %v3012, 0.0
        %v3046 = vsel %vm3028, %v3013, 0.0
        %v3047 = vsel %vm3028, %v3014, 0.0
        %v3048 = vsel %vm3028, %v3015, 0.0
        %v3049 = vsel %vm3028, %v3016, 0.0
        %v3050 = vsel %vm3028, %v3017, 0.0
        %v3051 = vsel %vm3028, %v3018, 0.0
        %v3052 = vsel %vm3028, %v3019, 0.0
        %v3053 = vsel %vm3028, %v3020, 0.0
        %v3054 = vsel %vm3028, %v3021, 0.0
        %v3055 = vsel %vm3028, %v3022, 0.0
        %v3056 = vsel %vm3028, %v3023, 0.0
        %v3057 = vsel %vm3028, %v3024, 0.0
        %v3058 = vsel %vm3028, %v3025, 0.0
        %v3059 = vsel %vm3028, %v3026, 0.0
        %v3060 = vsel %vm3028, %v3027, 0.0
        %3061 = vst [vmem:[%s209] sm:$0xff] %v3029
        %3062 = vst [vmem:[%s209 + $0x8] sm:$0xff] %v3030
        %3063 = vst [vmem:[%s209 + $0x10] sm:$0xff] %v3031
        %3064 = vst [vmem:[%s209 + $0x18] sm:$0xff] %v3032
        %3065 = vst [vmem:[%s209 + $0x20] sm:$0xff] %v3033
        %3066 = vst [vmem:[%s209 + $0x28] sm:$0xff] %v3034
        %3067 = vst [vmem:[%s209 + $0x30] sm:$0xff] %v3035
        %3068 = vst [vmem:[%s209 + $0x38] sm:$0xff] %v3036
        %3069 = vst [vmem:[%s209 + $0x40] sm:$0xff] %v3037
        %3070 = vst [vmem:[%s209 + $0x48] sm:$0xff] %v3038
        %3071 = vst [vmem:[%s209 + $0x50] sm:$0xff] %v3039
        %3072 = vst [vmem:[%s209 + $0x58] sm:$0xff] %v3040
        %3073 = vst [vmem:[%s209 + $0x60] sm:$0xff] %v3041
        %3074 = vst [vmem:[%s209 + $0x68] sm:$0xff] %v3042
        %3075 = vst [vmem:[%s209 + $0x70] sm:$0xff] %v3043
        %3076 = vst [vmem:[%s209 + $0x78] sm:$0xff] %v3044
        %3077 = vst [vmem:[%s209 + $0x80] sm:$0xff] %v3045
        %3078 = vst [vmem:[%s209 + $0x88] sm:$0xff] %v3046
        %3079 = vst [vmem:[%s209 + $0x90] sm:$0xff] %v3047
        %3080 = vst [vmem:[%s209 + $0x98] sm:$0xff] %v3048
        %3081 = vst [vmem:[%s209 + $0xa0] sm:$0xff] %v3049
        %3082 = vst [vmem:[%s209 + $0xa8] sm:$0xff] %v3050
        %3083 = vst [vmem:[%s209 + $0xb0] sm:$0xff] %v3051
        %3084 = vst [vmem:[%s209 + $0xb8] sm:$0xff] %v3052
        %3085 = vst [vmem:[%s209 + $0xc0] sm:$0xff] %v3053
        %3086 = vst [vmem:[%s209 + $0xc8] sm:$0xff] %v3054
        %3087 = vst [vmem:[%s209 + $0xd0] sm:$0xff] %v3055
        %3088 = vst [vmem:[%s209 + $0xd8] sm:$0xff] %v3056
        %3089 = vst [vmem:[%s209 + $0xe0] sm:$0xff] %v3057
        %3090 = vst [vmem:[%s209 + $0xe8] sm:$0xff] %v3058
        %3091 = vst [vmem:[%s209 + $0xf0] sm:$0xff] %v3059
        %3092 = vst [vmem:[%s209 + $0xf8] sm:$0xff] %v3060
        %s3093 = sand.u32 %s120, 1
        %s3094 = scalar_lea.sflag [#allocation3], %s3093
        %s3095 = sand.u32 %s120, 1
        %s3096 = smul.addr %s3095, 256
        %s3097 = scalar_lea.vmem [#allocation2], %s3096
        // Predicated region
        $region37: #{tpu_custom_call.1} parent=35 // pred_check
          %p3098 = pneg %p130
        $region38: #{tpu_custom_call.1} parent=35 // pred_check_branch
          %3100 = sbr.rel (%p3098) target = $region40
        $region39: #{tpu_custom_call.1} parent=35 // pred_region
          %s3101 = smul.u32 32, %s18
          %s3103 = ssub.s32 4096, 4096
          %3104 = vsyncadd %s3094, %s3103
          %s3105 = smul.addr %s3101, 128
          %s3106 = scalar_lea.hbm %s4, %s3105
          %s3107 = sshll.u32 %s3097, 4
          %s3108 = int_to_ptr.vmem [resolvable:$true] %s3107
          %3113 = dma.vmem_to_hbm [thread:$0]  %s3108, 4096, %s3106, %s3094, 128, 128, 8
        $region40: #{tpu_custom_call.1} parent=35 // pred_fallthru
          _
      $region36: #{tpu_custom_call.1} parent=5 // pred_fallthru
        _
      %p3114 = scmp.le.s32.totalorder 2, %s13
      // Predicated region
      $region41: #{tpu_custom_call.1} parent=5 // pred_check
        %p3115 = pneg %p3114
      $region42: #{tpu_custom_call.1} parent=5 // pred_check_branch
        %3117 = sbr.rel (%p3115) target = $region44
      $region43: #{tpu_custom_call.1} parent=5 // pred_region
        %s3118 = ssub.s32 %s13, 2
        // Predicated region
        $region45: #{tpu_custom_call.1} parent=43 // pred_check
          %p3119 = pneg %p136
        $region46: #{tpu_custom_call.1} parent=43 // pred_check_branch
          %3121 = sbr.rel (%p3119) target = $region48
        $region47: #{tpu_custom_call.1} parent=43 // pred_region
          %s3122 = sand.u32 %s121, 1
          %s3123 = scalar_lea.sflag [#allocation3], %s3122
          %s3124 = sand.u32 %s121, 1
          %s3125 = smul.addr %s3124, 256
          %s3126 = scalar_lea.vmem [#allocation2], %s3125
          %3127 = dma.done %s3123, 4096
        $region48: #{tpu_custom_call.1} parent=43 // pred_fallthru
          _
      $region44: #{tpu_custom_call.1} parent=5 // pred_fallthru
        _
    $region6: #{tpu_custom_call.1} parent=1 // loop_footer
      %s17 = sadd.s32 1, %s13
    $region7: #{tpu_custom_call.1} parent=1 // loop_footer_branch
      %12 = sbr.rel target = $region3
    $region8: #{tpu_custom_call.1} parent=1 // loop_exit
      _
    %3128 = vsyncpa [#allocation3], 1
    %s3129 = scalar_lea.sflag [#allocation3], 1
    %3130 = vsyncpa %s3129, 1

</llo_original>
